<compile_context>
chip_gen: v7x
topology: tpu7x:2x2x1
jax: 0.10.0
libtpu: 0.0.40
codegen_flags: <defaults>
</compile_context>

<pallas_src>
import jax
import jax.numpy as jnp
from jax import lax
from jax.experimental import pallas as pl
from jax.experimental.pallas import tpu as pltpu
import numpy as np


def _vmem_limit_bytes():
    """Generation-aware scoped-VMEM limit (3/4 of physical, >= 32 MiB)."""
    try:
        cap = int(pltpu.get_tpu_info().vmem_capacity_bytes)
    except Exception:
        cap = 64 * 1024 * 1024
    return max(32 * 1024 * 1024, (cap * 3) // 4)


def lstm_proj_kernel(x_ref, h0_ref, c0_ref,
                     wih0_ref, whh0_ref, b0_ref, weff0_ref,
                     wihe1_ref, whh1_ref, b1_ref, weff1_ref, whr1_ref,
                     out_ref,
                     xg_scr, hraw_scr, hg_state, c_state):
    """One T-chunk of a 2-layer projected LSTM.

    x_ref    : (Tc*B, D_in)  streamed time-major input chunk (fp32)
    h0_ref   : (2, B, P)     c0_ref : (2, B, H)   (fp32 initial state)
    wih0     : (D_in, 4H) bf16   whh* : (P, 4H) fp32 (init only)   b* : (1, 4H) fp32
    weff*    : (H, 4H) bf16  = W_hr @ W_hh        (fused recurrent matrix)
    wihe1    : (H, 4H) bf16  = W_hr0 @ W_ih1      (fused layer-1 input matrix)
    whr1     : (H, P_pad) bf16                     (final projection, lane-padded)
    out_ref  : (Tc*B, P_pad) streamed output chunk
    xg_scr   : (Tc*B, 4H) f32    hraw_scr : (Tc*B, H) f32
    hg_state : (2, B, 4H) f32    c_state  : (2, B, H) f32   (carried across chunks)
    """
    TcB, H = hraw_scr.shape
    B = c_state.shape[1]
    Tc = TcB // B

    # ---- chunk 0: seed the carried recurrent state from (h0, c0) ----
    @pl.when(pl.program_id(0) == 0)
    def _init():
        hg_state[0] = jnp.dot(h0_ref[0], whh0_ref[...],
                              preferred_element_type=jnp.float32)
        hg_state[1] = jnp.dot(h0_ref[1], whh1_ref[...],
                              preferred_element_type=jnp.float32)
        c_state[0] = c0_ref[0]
        c_state[1] = c0_ref[1]

    def run_layer(layer, weff_ref):
        weff = weff_ref[...]                       # bf16 (H, 4H), loop-invariant
        hg0 = hg_state[layer]                      # (B, 4H) f32
        c_init = c_state[layer]                    # (B, H)  f32

        def step(t, carry):
            hg, c = carry
            row = pl.multiple_of(t * B, B)                          # sublane aligned
            gates = xg_scr[pl.ds(row, B), :] + hg                   # (B, 4H) fp32
            # Full-width nonlinearities: 2 EUP pushes for all four gates.
            sig = jax.nn.sigmoid(gates)
            th = jnp.tanh(gates)
            i_g = sig[:, 0 * H:1 * H]
            f_g = sig[:, 1 * H:2 * H]
            g_g = th[:, 2 * H:3 * H]
            o_g = sig[:, 3 * H:4 * H]
            c_new = f_g * c + i_g * g_g                             # fp32 cell
            h_raw = o_g * jnp.tanh(c_new)                           # (B, H) fp32
            hraw_scr[pl.ds(row, B), :] = h_raw                      # off the serial chain
            # Single serial per-step matmul, bf16 operands, fp32 accumulate.
            hg_next = jnp.dot(h_raw.astype(jnp.bfloat16), weff,
                              preferred_element_type=jnp.float32)
            return hg_next, c_new

        hg_f, c_f = lax.fori_loop(0, Tc, step, (hg0, c_init), unroll=True)
        hg_state[layer] = hg_f
        c_state[layer] = c_f

    # ---- layer 0: batched input->gate contribution for this chunk ----
    xg_scr[...] = (jnp.dot(x_ref[...].astype(jnp.bfloat16), wih0_ref[...],
                           preferred_element_type=jnp.float32)
                   + b0_ref[...])
    run_layer(0, weff0_ref)

    # ---- layer 1: batched (projection-fused) input->gate contribution ----
    xg_scr[...] = (jnp.dot(hraw_scr[...].astype(jnp.bfloat16), wihe1_ref[...],
                           preferred_element_type=jnp.float32)
                   + b1_ref[...])
    run_layer(1, weff1_ref)

    # ---- final projection of layer-1 raw hiddens: one lane-dense slab store ----
    out_ref[...] = jnp.dot(hraw_scr[...].astype(jnp.bfloat16), whr1_ref[...],
                           preferred_element_type=jnp.float32
                           ).astype(out_ref.dtype)


def decoder2_forward(x, hidden, params):
    """x: (B, T, input_size); hidden = (h0 (L,B,P), c0 (L,B,H)). Returns (B, T, P)."""
    h0, c0 = hidden
    (wih0, whh0, b0, whr0), (wih1, whh1, b1, whr1) = params
    B, T, Din = x.shape
    L = h0.shape[0]
    P = h0.shape[-1]
    H = c0.shape[-1]
    G4H = 4 * H

    # Pad batch to full sublanes (multiple of 8); padded rows are zero, stay
    # row-independent through the recurrence, and are sliced off below.
    B_pad = max(8, ((B + 7) // 8) * 8)
    pad_b = B_pad - B
    xt = jnp.transpose(x, (1, 0, 2))                      # (T, B, Din) time-major
    if pad_b:
        xt = jnp.pad(xt, ((0, 0), (0, pad_b), (0, 0)))
        h0p = jnp.pad(h0, ((0, 0), (0, pad_b), (0, 0)))
        c0p = jnp.pad(c0, ((0, 0), (0, pad_b), (0, 0)))
    else:
        h0p, c0p = h0, c0
    x2d = xt.reshape(T * B_pad, Din)

    # Fused weights: products in fp32, MXU operands cast to bf16 once here.
    weff0 = (whr0 @ whh0).astype(jnp.bfloat16)            # (H, 4H)
    weff1 = (whr1 @ whh1).astype(jnp.bfloat16)            # (H, 4H)
    wihe1 = (whr0 @ wih1).astype(jnp.bfloat16)            # (H, 4H)
    wih0_bf = wih0.astype(jnp.bfloat16)                   # (Din, 4H)

    # Lane-dense output: pad projection width to a multiple of 128.
    P_pad = max(128, ((P + 127) // 128) * 128)
    whr1p = jnp.pad(whr1, ((0, 0), (0, P_pad - P))).astype(jnp.bfloat16)

    # T-chunk grid: bounds VMEM to the chunk, streams x/out, keeps unroll small.
    # Prefer >= 2 grid steps when T allows so the carried state path is exercised.
    Tc = max(c for c in (16, 8, 4, 2, 1)
             if T % c == 0 and (T // c) >= (2 if T > 1 else 1))
    grid = (T // Tc,)

    in_specs = [
        pl.BlockSpec((Tc * B_pad, Din), lambda t: (t, 0)),   # x chunk (streamed)
        pl.BlockSpec((L, B_pad, P), lambda t: (0, 0, 0)),    # h0 (resident)
        pl.BlockSpec((L, B_pad, H), lambda t: (0, 0, 0)),    # c0 (resident)
        pl.BlockSpec((Din, G4H), lambda t: (0, 0)),          # W_ih0 (bf16)
        pl.BlockSpec((P, G4H), lambda t: (0, 0)),            # W_hh0 (f32, init only)
        pl.BlockSpec((1, G4H), lambda t: (0, 0)),            # b0
        pl.BlockSpec((H, G4H), lambda t: (0, 0)),            # W_eff0 (bf16)
        pl.BlockSpec((H, G4H), lambda t: (0, 0)),            # W_ih1_eff (bf16)
        pl.BlockSpec((P, G4H), lambda t: (0, 0)),            # W_hh1 (f32, init only)
        pl.BlockSpec((1, G4H), lambda t: (0, 0)),            # b1
        pl.BlockSpec((H, G4H), lambda t: (0, 0)),            # W_eff1 (bf16)
        pl.BlockSpec((H, P_pad), lambda t: (0, 0)),          # W_hr1 padded (bf16)
    ]
    out_specs = pl.BlockSpec((Tc * B_pad, P_pad), lambda t: (t, 0))

    out2d = pl.pallas_call(
        lstm_proj_kernel,
        out_shape=jax.ShapeDtypeStruct((T * B_pad, P_pad), x.dtype),
        grid_spec=pltpu.PrefetchScalarGridSpec(
            num_scalar_prefetch=0,
            grid=grid,
            in_specs=in_specs,
            out_specs=out_specs,
            scratch_shapes=[
                pltpu.VMEM((Tc * B_pad, G4H), jnp.float32),   # xg chunk
                pltpu.VMEM((Tc * B_pad, H), jnp.float32),     # h_raw chunk
                pltpu.VMEM((L, B_pad, G4H), jnp.float32),     # carried hg state
                pltpu.VMEM((L, B_pad, H), jnp.float32),       # carried cell state
            ]),
        compiler_params=pltpu.CompilerParams(
            dimension_semantics=("arbitrary",),               # state carried over T
            vmem_limit_bytes=_vmem_limit_bytes()),
    )(x2d, h0p, c0p,
      wih0_bf, whh0, b0, weff0,
      wihe1, whh1, b1, weff1, whr1p)

    # Epilogue: drop padding, back to (B, T, P).  (At these shapes this is
    # negligible; for large T fold the transpose into the output BlockSpec.)
    out = out2d.reshape(T, B_pad, P_pad)[:, :B, :P]
    return jnp.transpose(out, (1, 0, 2))


def make_params(key, input_size, hidden_size, output_size, num_layers=2):
    """Deterministic init matching PyTorch LSTM(proj_size) parameter shapes,
    stored pre-transposed for the kernel: W_ih (D_in,4H), W_hh (P,4H), b (1,4H),
    W_hr (H,P)."""
    k = 1.0 / np.sqrt(hidden_size)
    params = []
    for layer in range(num_layers):
        d_in = input_size if layer == 0 else output_size
        key, *ks = jax.random.split(key, 6)
        wih = jax.random.uniform(ks[0], (d_in, 4 * hidden_size),
                                 jnp.float32, -k, k)
        whh = jax.random.uniform(ks[1], (output_size, 4 * hidden_size),
                                 jnp.float32, -k, k)
        b_ih = jax.random.uniform(ks[2], (4 * hidden_size,), jnp.float32, -k, k)
        b_hh = jax.random.uniform(ks[3], (4 * hidden_size,), jnp.float32, -k, k)
        whr = jax.random.uniform(ks[4], (hidden_size, output_size),
                                 jnp.float32, -k, k)
        params.append((wih, whh, (b_ih + b_hh).reshape(1, -1), whr))
    return params


def decoder2_ref(x, hidden, params):
    """Pure-JAX fp32 reference (unfused math, plain loops) for validation."""
    h0, c0 = hidden
    B, T, _ = x.shape
    H = c0.shape[-1]
    layer_in = x
    for layer, (wih, whh, b, whr) in enumerate(params):
        h = h0[layer]
        c = c0[layer]
        outs = []
        for t in range(T):
            gates = layer_in[:, t] @ wih + h @ whh + b
            i_g = jax.nn.sigmoid(gates[:, 0 * H:1 * H])
            f_g = jax.nn.sigmoid(gates[:, 1 * H:2 * H])
            g_g = jnp.tanh(gates[:, 2 * H:3 * H])
            o_g = jax.nn.sigmoid(gates[:, 3 * H:4 * H])
            c = f_g * c + i_g * g_g
            h = (o_g * jnp.tanh(c)) @ whr
            outs.append(h)
        layer_in = jnp.stack(outs, axis=1)
    return layer_in


if __name__ == "__main__":
    input_size, hidden_size, output_size, num_layers = 16, 32, 8, 2
    B, T = 2, 8

    key = jax.random.PRNGKey(0)
    k_x, k_h, k_c, k_p = jax.random.split(key, 4)

    x = jax.random.normal(k_x, (B, T, input_size), jnp.float32)
    h0 = jax.random.normal(k_h, (num_layers, B, output_size), jnp.float32)
    c0 = jax.random.normal(k_c, (num_layers, B, hidden_size), jnp.float32)
    params = make_params(k_p, input_size, hidden_size, output_size, num_layers)

    out = decoder2_forward(x, (h0, c0), params)
    out = jax.block_until_ready(out)

    ref = decoder2_ref(x, (h0, c0), params)
    assert out.shape == (B, T, output_size)
    # bf16 MXU operands + fused weights => ~1e-2-level deviation vs fp32 reference.
    np.testing.assert_allclose(np.asarray(out), np.asarray(ref),
                               rtol=3e-2, atol=3e-2)

    print("KERNEL_OK")
</pallas_src>

<mosaic_0001>
module attributes {stable_mosaic.version = 11 : i64} {
  func.func @lstm_proj_kernel(%arg0: i32, %arg1: memref<32x16xf32, #tpu.memory_space<vmem>>, %arg2: memref<2x8x8xf32, #tpu.memory_space<vmem>>, %arg3: memref<2x8x32xf32, #tpu.memory_space<vmem>>, %arg4: memref<16x128xbf16, #tpu.memory_space<vmem>>, %arg5: memref<8x128xf32, #tpu.memory_space<vmem>>, %arg6: memref<1x128xf32, #tpu.memory_space<vmem>>, %arg7: memref<32x128xbf16, #tpu.memory_space<vmem>>, %arg8: memref<32x128xbf16, #tpu.memory_space<vmem>>, %arg9: memref<8x128xf32, #tpu.memory_space<vmem>>, %arg10: memref<1x128xf32, #tpu.memory_space<vmem>>, %arg11: memref<32x128xbf16, #tpu.memory_space<vmem>>, %arg12: memref<32x128xbf16, #tpu.memory_space<vmem>>, %arg13: memref<32x128xf32, #tpu.memory_space<vmem>>, %arg14: memref<32x128xf32, #tpu.memory_space<vmem>>, %arg15: memref<32x32xf32, #tpu.memory_space<vmem>>, %arg16: memref<2x8x128xf32, #tpu.memory_space<vmem>>, %arg17: memref<2x8x32xf32, #tpu.memory_space<vmem>>) attributes {dimension_semantics = [#tpu.dimension_semantics<arbitrary>], iteration_bounds = array<i64: 2>, scalar_prefetch = 0 : i64, scratch_operands = 4 : i64, tpu.core_type = #tpu.core_type<tc>, window_params = [{transform_indices = @transform_0, window_bounds = array<i64: 32, 16>}, {pipeline_mode = #tpu.pipeline_mode<synchronous>, transform_indices = @transform_1, window_bounds = array<i64: 2, 8, 8>}, {pipeline_mode = #tpu.pipeline_mode<synchronous>, transform_indices = @transform_2, window_bounds = array<i64: 2, 8, 32>}, {pipeline_mode = #tpu.pipeline_mode<synchronous>, transform_indices = @transform_3, window_bounds = array<i64: 16, 128>}, {pipeline_mode = #tpu.pipeline_mode<synchronous>, transform_indices = @transform_4, window_bounds = array<i64: 8, 128>}, {pipeline_mode = #tpu.pipeline_mode<synchronous>, transform_indices = @transform_5, window_bounds = array<i64: 1, 128>}, {pipeline_mode = #tpu.pipeline_mode<synchronous>, transform_indices = @transform_6, window_bounds = array<i64: 32, 128>}, {pipeline_mode = #tpu.pipeline_mode<synchronous>, transform_indices = @transform_7, window_bounds = array<i64: 32, 128>}, {pipeline_mode = #tpu.pipeline_mode<synchronous>, transform_indices = @transform_8, window_bounds = array<i64: 8, 128>}, {pipeline_mode = #tpu.pipeline_mode<synchronous>, transform_indices = @transform_9, window_bounds = array<i64: 1, 128>}, {pipeline_mode = #tpu.pipeline_mode<synchronous>, transform_indices = @transform_10, window_bounds = array<i64: 32, 128>}, {pipeline_mode = #tpu.pipeline_mode<synchronous>, transform_indices = @transform_11, window_bounds = array<i64: 32, 128>}, {transform_indices = @transform_12, window_bounds = array<i64: 32, 128>}]} {
    %c0_i32 = arith.constant 0 : i32
    %0 = arith.cmpi eq, %arg0, %c0_i32 : i32
    %1 = arith.extui %0 : i1 to i32
    %c0_i32_0 = arith.constant 0 : i32
    %2 = arith.cmpi ne, %1, %c0_i32_0 : i32
    scf.if %2 {
      %c0_96 = arith.constant 0 : index
      %c0_97 = arith.constant 0 : index
      %c0_98 = arith.constant 0 : index
      %238 = vector.load %arg2[%c0_96, %c0_97, %c0_98] : memref<2x8x8xf32, #tpu.memory_space<vmem>>, vector<1x8x8xf32>
      %239 = vector.shape_cast %238 : vector<1x8x8xf32> to vector<8x8xf32>
      %c0_99 = arith.constant 0 : index
      %c0_100 = arith.constant 0 : index
      %240 = vector.load %arg5[%c0_99, %c0_100] : memref<8x128xf32, #tpu.memory_space<vmem>>, vector<8x128xf32>
      %cst_101 = arith.constant dense<0.000000e+00> : vector<8x128xf32>
      %241 = tpu.matmul %239, %240, %cst_101 {dimension_numbers = #tpu.dot_dimension_numbers<[1], [0], [0], [1], [0, 0, 1, 1], [], []>} : vector<8x8xf32>, vector<8x128xf32>, vector<8x128xf32> -> vector<8x128xf32>
      %c0_102 = arith.constant 0 : index
      %c0_103 = arith.constant 0 : index
      %c0_104 = arith.constant 0 : index
      %242 = vector.load %arg16[%c0_102, %c0_103, %c0_104] : memref<2x8x128xf32, #tpu.memory_space<vmem>>, vector<1x8x128xf32>
      %243 = vector.shape_cast %242 : vector<1x8x128xf32> to vector<8x128xf32>
      %244 = vector.shape_cast %241 : vector<8x128xf32> to vector<1x8x128xf32>
      tpu.vector_store %arg16[%c0_102, %c0_103, %c0_104], %244 {strides = array<i32>} : memref<2x8x128xf32, #tpu.memory_space<vmem>>, vector<1x8x128xf32>,
      %c1_105 = arith.constant 1 : index
      %c0_106 = arith.constant 0 : index
      %c0_107 = arith.constant 0 : index
      %245 = vector.load %arg2[%c1_105, %c0_106, %c0_107] : memref<2x8x8xf32, #tpu.memory_space<vmem>>, vector<1x8x8xf32>
      %246 = vector.shape_cast %245 : vector<1x8x8xf32> to vector<8x8xf32>
      %c0_108 = arith.constant 0 : index
      %c0_109 = arith.constant 0 : index
      %247 = vector.load %arg9[%c0_108, %c0_109] : memref<8x128xf32, #tpu.memory_space<vmem>>, vector<8x128xf32>
      %cst_110 = arith.constant dense<0.000000e+00> : vector<8x128xf32>
      %248 = tpu.matmul %246, %247, %cst_110 {dimension_numbers = #tpu.dot_dimension_numbers<[1], [0], [0], [1], [0, 0, 1, 1], [], []>} : vector<8x8xf32>, vector<8x128xf32>, vector<8x128xf32> -> vector<8x128xf32>
      %c1_111 = arith.constant 1 : index
      %c0_112 = arith.constant 0 : index
      %c0_113 = arith.constant 0 : index
      %249 = vector.load %arg16[%c1_111, %c0_112, %c0_113] : memref<2x8x128xf32, #tpu.memory_space<vmem>>, vector<1x8x128xf32>
      %250 = vector.shape_cast %249 : vector<1x8x128xf32> to vector<8x128xf32>
      %251 = vector.shape_cast %248 : vector<8x128xf32> to vector<1x8x128xf32>
      tpu.vector_store %arg16[%c1_111, %c0_112, %c0_113], %251 {strides = array<i32>} : memref<2x8x128xf32, #tpu.memory_space<vmem>>, vector<1x8x128xf32>,
      %c0_114 = arith.constant 0 : index
      %c0_115 = arith.constant 0 : index
      %c0_116 = arith.constant 0 : index
      %252 = vector.load %arg3[%c0_114, %c0_115, %c0_116] : memref<2x8x32xf32, #tpu.memory_space<vmem>>, vector<1x8x32xf32>
      %253 = vector.shape_cast %252 : vector<1x8x32xf32> to vector<8x32xf32>
      %c0_117 = arith.constant 0 : index
      %c0_118 = arith.constant 0 : index
      %c0_119 = arith.constant 0 : index
      %254 = vector.load %arg17[%c0_117, %c0_118, %c0_119] : memref<2x8x32xf32, #tpu.memory_space<vmem>>, vector<1x8x32xf32>
      %255 = vector.shape_cast %254 : vector<1x8x32xf32> to vector<8x32xf32>
      %256 = vector.shape_cast %253 : vector<8x32xf32> to vector<1x8x32xf32>
      tpu.vector_store %arg17[%c0_117, %c0_118, %c0_119], %256 {strides = array<i32>} : memref<2x8x32xf32, #tpu.memory_space<vmem>>, vector<1x8x32xf32>,
      %c1_120 = arith.constant 1 : index
      %c0_121 = arith.constant 0 : index
      %c0_122 = arith.constant 0 : index
      %257 = vector.load %arg3[%c1_120, %c0_121, %c0_122] : memref<2x8x32xf32, #tpu.memory_space<vmem>>, vector<1x8x32xf32>
      %258 = vector.shape_cast %257 : vector<1x8x32xf32> to vector<8x32xf32>
      %c1_123 = arith.constant 1 : index
      %c0_124 = arith.constant 0 : index
      %c0_125 = arith.constant 0 : index
      %259 = vector.load %arg17[%c1_123, %c0_124, %c0_125] : memref<2x8x32xf32, #tpu.memory_space<vmem>>, vector<1x8x32xf32>
      %260 = vector.shape_cast %259 : vector<1x8x32xf32> to vector<8x32xf32>
      %261 = vector.shape_cast %258 : vector<8x32xf32> to vector<1x8x32xf32>
      tpu.vector_store %arg17[%c1_123, %c0_124, %c0_125], %261 {strides = array<i32>} : memref<2x8x32xf32, #tpu.memory_space<vmem>>, vector<1x8x32xf32>,
    } else {
    }
    %c0 = arith.constant 0 : index
    %c0_1 = arith.constant 0 : index
    %3 = vector.load %arg1[%c0, %c0_1] : memref<32x16xf32, #tpu.memory_space<vmem>>, vector<32x16xf32>
    %4 = arith.truncf %3 : vector<32x16xf32> to vector<32x16xbf16>
    %c0_2 = arith.constant 0 : index
    %c0_3 = arith.constant 0 : index
    %5 = vector.load %arg4[%c0_2, %c0_3] : memref<16x128xbf16, #tpu.memory_space<vmem>>, vector<16x128xbf16>
    %cst = arith.constant dense<0.000000e+00> : vector<32x128xf32>
    %6 = tpu.matmul %4, %5, %cst {dimension_numbers = #tpu.dot_dimension_numbers<[1], [0], [0], [1], [0, 0, 1, 1], [], []>} : vector<32x16xbf16>, vector<16x128xbf16>, vector<32x128xf32> -> vector<32x128xf32>
    %c0_4 = arith.constant 0 : index
    %c0_5 = arith.constant 0 : index
    %7 = vector.load %arg6[%c0_4, %c0_5] : memref<1x128xf32, #tpu.memory_space<vmem>>, vector<1x128xf32>
    %8 = vector.broadcast %7 : vector<1x128xf32> to vector<32x128xf32>
    %9 = arith.addf %6, %8 : vector<32x128xf32>
    %c0_6 = arith.constant 0 : index
    %c0_7 = arith.constant 0 : index
    %10 = vector.load %arg14[%c0_6, %c0_7] : memref<32x128xf32, #tpu.memory_space<vmem>>, vector<32x128xf32>
    tpu.vector_store %arg14[%c0_6, %c0_7], %9 {strides = array<i32>} : memref<32x128xf32, #tpu.memory_space<vmem>>, vector<32x128xf32>,
    %c0_8 = arith.constant 0 : index
    %c0_9 = arith.constant 0 : index
    %11 = vector.load %arg7[%c0_8, %c0_9] : memref<32x128xbf16, #tpu.memory_space<vmem>>, vector<32x128xbf16>
    %c0_10 = arith.constant 0 : index
    %c0_11 = arith.constant 0 : index
    %c0_12 = arith.constant 0 : index
    %12 = vector.load %arg16[%c0_10, %c0_11, %c0_12] : memref<2x8x128xf32, #tpu.memory_space<vmem>>, vector<1x8x128xf32>
    %13 = vector.shape_cast %12 : vector<1x8x128xf32> to vector<8x128xf32>
    %c0_13 = arith.constant 0 : index
    %c0_14 = arith.constant 0 : index
    %c0_15 = arith.constant 0 : index
    %14 = vector.load %arg17[%c0_13, %c0_14, %c0_15] : memref<2x8x32xf32, #tpu.memory_space<vmem>>, vector<1x8x32xf32>
    %15 = vector.shape_cast %14 : vector<1x8x32xf32> to vector<8x32xf32>
    %c0_i32_16 = arith.constant 0 : i32
    %c8_i32 = arith.constant 8 : i32
    %16 = arith.muli %c0_i32_16, %c8_i32 : i32
    %17 = tpu.assume_multiple %16, 8 : i32
    %18 = arith.index_cast %17 : i32 to index
    %c0_17 = arith.constant 0 : index
    %19 = vector.load %arg14[%18, %c0_17] : memref<32x128xf32, #tpu.memory_space<vmem>>, vector<8x128xf32>
    %20 = arith.addf %19, %13 : vector<8x128xf32>
    %21 = arith.negf %20 : vector<8x128xf32>
    %22 = math.exp %21 : vector<8x128xf32>
    %cst_18 = arith.constant 1.000000e+00 : f32
    %23 = vector.broadcast %cst_18 : f32 to vector<8x128xf32>
    %24 = arith.addf %23, %22 : vector<8x128xf32>
    %25 = arith.divf %23, %24 : vector<8x128xf32>
    %26 = math.tanh %20 : vector<8x128xf32>
    %27 = vector.extract_strided_slice %25 {offsets = [0, 0], sizes = [8, 32], strides = [1, 1]} : vector<8x128xf32> to vector<8x32xf32>
    %28 = vector.extract_strided_slice %25 {offsets = [0, 32], sizes = [8, 32], strides = [1, 1]} : vector<8x128xf32> to vector<8x32xf32>
    %29 = vector.extract_strided_slice %26 {offsets = [0, 64], sizes = [8, 32], strides = [1, 1]} : vector<8x128xf32> to vector<8x32xf32>
    %30 = vector.extract_strided_slice %25 {offsets = [0, 96], sizes = [8, 32], strides = [1, 1]} : vector<8x128xf32> to vector<8x32xf32>
    %31 = arith.mulf %28, %15 : vector<8x32xf32>
    %32 = arith.mulf %27, %29 : vector<8x32xf32>
    %33 = arith.addf %31, %32 : vector<8x32xf32>
    %34 = math.tanh %33 : vector<8x32xf32>
    %35 = arith.mulf %30, %34 : vector<8x32xf32>
    %36 = arith.index_cast %17 : i32 to index
    %c0_19 = arith.constant 0 : index
    %37 = vector.load %arg15[%36, %c0_19] : memref<32x32xf32, #tpu.memory_space<vmem>>, vector<8x32xf32>
    tpu.vector_store %arg15[%36, %c0_19], %35 {strides = array<i32>} : memref<32x32xf32, #tpu.memory_space<vmem>>, vector<8x32xf32>,
    %38 = arith.truncf %35 : vector<8x32xf32> to vector<8x32xbf16>
    %cst_20 = arith.constant dense<0.000000e+00> : vector<8x128xf32>
    %39 = tpu.matmul %38, %11, %cst_20 {dimension_numbers = #tpu.dot_dimension_numbers<[1], [0], [0], [1], [0, 0, 1, 1], [], []>} : vector<8x32xbf16>, vector<32x128xbf16>, vector<8x128xf32> -> vector<8x128xf32>
    %c1_i32 = arith.constant 1 : i32
    %c8_i32_21 = arith.constant 8 : i32
    %40 = arith.muli %c1_i32, %c8_i32_21 : i32
    %41 = tpu.assume_multiple %40, 8 : i32
    %42 = arith.index_cast %41 : i32 to index
    %c0_22 = arith.constant 0 : index
    %43 = vector.load %arg14[%42, %c0_22] : memref<32x128xf32, #tpu.memory_space<vmem>>, vector<8x128xf32>
    %44 = arith.addf %43, %39 : vector<8x128xf32>
    %45 = arith.negf %44 : vector<8x128xf32>
    %46 = math.exp %45 : vector<8x128xf32>
    %cst_23 = arith.constant 1.000000e+00 : f32
    %47 = vector.broadcast %cst_23 : f32 to vector<8x128xf32>
    %48 = arith.addf %47, %46 : vector<8x128xf32>
    %49 = arith.divf %47, %48 : vector<8x128xf32>
    %50 = math.tanh %44 : vector<8x128xf32>
    %51 = vector.extract_strided_slice %49 {offsets = [0, 0], sizes = [8, 32], strides = [1, 1]} : vector<8x128xf32> to vector<8x32xf32>
    %52 = vector.extract_strided_slice %49 {offsets = [0, 32], sizes = [8, 32], strides = [1, 1]} : vector<8x128xf32> to vector<8x32xf32>
    %53 = vector.extract_strided_slice %50 {offsets = [0, 64], sizes = [8, 32], strides = [1, 1]} : vector<8x128xf32> to vector<8x32xf32>
    %54 = vector.extract_strided_slice %49 {offsets = [0, 96], sizes = [8, 32], strides = [1, 1]} : vector<8x128xf32> to vector<8x32xf32>
    %55 = arith.mulf %52, %33 : vector<8x32xf32>
    %56 = arith.mulf %51, %53 : vector<8x32xf32>
    %57 = arith.addf %55, %56 : vector<8x32xf32>
    %58 = math.tanh %57 : vector<8x32xf32>
    %59 = arith.mulf %54, %58 : vector<8x32xf32>
    %60 = arith.index_cast %41 : i32 to index
    %c0_24 = arith.constant 0 : index
    %61 = vector.load %arg15[%60, %c0_24] : memref<32x32xf32, #tpu.memory_space<vmem>>, vector<8x32xf32>
    tpu.vector_store %arg15[%60, %c0_24], %59 {strides = array<i32>} : memref<32x32xf32, #tpu.memory_space<vmem>>, vector<8x32xf32>,
    %62 = arith.truncf %59 : vector<8x32xf32> to vector<8x32xbf16>
    %cst_25 = arith.constant dense<0.000000e+00> : vector<8x128xf32>
    %63 = tpu.matmul %62, %11, %cst_25 {dimension_numbers = #tpu.dot_dimension_numbers<[1], [0], [0], [1], [0, 0, 1, 1], [], []>} : vector<8x32xbf16>, vector<32x128xbf16>, vector<8x128xf32> -> vector<8x128xf32>
    %c2_i32 = arith.constant 2 : i32
    %c8_i32_26 = arith.constant 8 : i32
    %64 = arith.muli %c2_i32, %c8_i32_26 : i32
    %65 = tpu.assume_multiple %64, 8 : i32
    %66 = arith.index_cast %65 : i32 to index
    %c0_27 = arith.constant 0 : index
    %67 = vector.load %arg14[%66, %c0_27] : memref<32x128xf32, #tpu.memory_space<vmem>>, vector<8x128xf32>
    %68 = arith.addf %67, %63 : vector<8x128xf32>
    %69 = arith.negf %68 : vector<8x128xf32>
    %70 = math.exp %69 : vector<8x128xf32>
    %cst_28 = arith.constant 1.000000e+00 : f32
    %71 = vector.broadcast %cst_28 : f32 to vector<8x128xf32>
    %72 = arith.addf %71, %70 : vector<8x128xf32>
    %73 = arith.divf %71, %72 : vector<8x128xf32>
    %74 = math.tanh %68 : vector<8x128xf32>
    %75 = vector.extract_strided_slice %73 {offsets = [0, 0], sizes = [8, 32], strides = [1, 1]} : vector<8x128xf32> to vector<8x32xf32>
    %76 = vector.extract_strided_slice %73 {offsets = [0, 32], sizes = [8, 32], strides = [1, 1]} : vector<8x128xf32> to vector<8x32xf32>
    %77 = vector.extract_strided_slice %74 {offsets = [0, 64], sizes = [8, 32], strides = [1, 1]} : vector<8x128xf32> to vector<8x32xf32>
    %78 = vector.extract_strided_slice %73 {offsets = [0, 96], sizes = [8, 32], strides = [1, 1]} : vector<8x128xf32> to vector<8x32xf32>
    %79 = arith.mulf %76, %57 : vector<8x32xf32>
    %80 = arith.mulf %75, %77 : vector<8x32xf32>
    %81 = arith.addf %79, %80 : vector<8x32xf32>
    %82 = math.tanh %81 : vector<8x32xf32>
    %83 = arith.mulf %78, %82 : vector<8x32xf32>
    %84 = arith.index_cast %65 : i32 to index
    %c0_29 = arith.constant 0 : index
    %85 = vector.load %arg15[%84, %c0_29] : memref<32x32xf32, #tpu.memory_space<vmem>>, vector<8x32xf32>
    tpu.vector_store %arg15[%84, %c0_29], %83 {strides = array<i32>} : memref<32x32xf32, #tpu.memory_space<vmem>>, vector<8x32xf32>,
    %86 = arith.truncf %83 : vector<8x32xf32> to vector<8x32xbf16>
    %cst_30 = arith.constant dense<0.000000e+00> : vector<8x128xf32>
    %87 = tpu.matmul %86, %11, %cst_30 {dimension_numbers = #tpu.dot_dimension_numbers<[1], [0], [0], [1], [0, 0, 1, 1], [], []>} : vector<8x32xbf16>, vector<32x128xbf16>, vector<8x128xf32> -> vector<8x128xf32>
    %c3_i32 = arith.constant 3 : i32
    %c8_i32_31 = arith.constant 8 : i32
    %88 = arith.muli %c3_i32, %c8_i32_31 : i32
    %89 = tpu.assume_multiple %88, 8 : i32
    %90 = arith.index_cast %89 : i32 to index
    %c0_32 = arith.constant 0 : index
    %91 = vector.load %arg14[%90, %c0_32] : memref<32x128xf32, #tpu.memory_space<vmem>>, vector<8x128xf32>
    %92 = arith.addf %91, %87 : vector<8x128xf32>
    %93 = arith.negf %92 : vector<8x128xf32>
    %94 = math.exp %93 : vector<8x128xf32>
    %cst_33 = arith.constant 1.000000e+00 : f32
    %95 = vector.broadcast %cst_33 : f32 to vector<8x128xf32>
    %96 = arith.addf %95, %94 : vector<8x128xf32>
    %97 = arith.divf %95, %96 : vector<8x128xf32>
    %98 = math.tanh %92 : vector<8x128xf32>
    %99 = vector.extract_strided_slice %97 {offsets = [0, 0], sizes = [8, 32], strides = [1, 1]} : vector<8x128xf32> to vector<8x32xf32>
    %100 = vector.extract_strided_slice %97 {offsets = [0, 32], sizes = [8, 32], strides = [1, 1]} : vector<8x128xf32> to vector<8x32xf32>
    %101 = vector.extract_strided_slice %98 {offsets = [0, 64], sizes = [8, 32], strides = [1, 1]} : vector<8x128xf32> to vector<8x32xf32>
    %102 = vector.extract_strided_slice %97 {offsets = [0, 96], sizes = [8, 32], strides = [1, 1]} : vector<8x128xf32> to vector<8x32xf32>
    %103 = arith.mulf %100, %81 : vector<8x32xf32>
    %104 = arith.mulf %99, %101 : vector<8x32xf32>
    %105 = arith.addf %103, %104 : vector<8x32xf32>
    %106 = math.tanh %105 : vector<8x32xf32>
    %107 = arith.mulf %102, %106 : vector<8x32xf32>
    %108 = arith.index_cast %89 : i32 to index
    %c0_34 = arith.constant 0 : index
    %109 = vector.load %arg15[%108, %c0_34] : memref<32x32xf32, #tpu.memory_space<vmem>>, vector<8x32xf32>
    tpu.vector_store %arg15[%108, %c0_34], %107 {strides = array<i32>} : memref<32x32xf32, #tpu.memory_space<vmem>>, vector<8x32xf32>,
    %110 = arith.truncf %107 : vector<8x32xf32> to vector<8x32xbf16>
    %cst_35 = arith.constant dense<0.000000e+00> : vector<8x128xf32>
    %111 = tpu.matmul %110, %11, %cst_35 {dimension_numbers = #tpu.dot_dimension_numbers<[1], [0], [0], [1], [0, 0, 1, 1], [], []>} : vector<8x32xbf16>, vector<32x128xbf16>, vector<8x128xf32> -> vector<8x128xf32>
    %c4_i32 = arith.constant 4 : i32
    %c0_36 = arith.constant 0 : index
    %c0_37 = arith.constant 0 : index
    %c0_38 = arith.constant 0 : index
    %112 = vector.load %arg16[%c0_36, %c0_37, %c0_38] : memref<2x8x128xf32, #tpu.memory_space<vmem>>, vector<1x8x128xf32>
    %113 = vector.shape_cast %112 : vector<1x8x128xf32> to vector<8x128xf32>
    %114 = vector.shape_cast %111 : vector<8x128xf32> to vector<1x8x128xf32>
    tpu.vector_store %arg16[%c0_36, %c0_37, %c0_38], %114 {strides = array<i32>} : memref<2x8x128xf32, #tpu.memory_space<vmem>>, vector<1x8x128xf32>,
    %c0_39 = arith.constant 0 : index
    %c0_40 = arith.constant 0 : index
    %c0_41 = arith.constant 0 : index
    %115 = vector.load %arg17[%c0_39, %c0_40, %c0_41] : memref<2x8x32xf32, #tpu.memory_space<vmem>>, vector<1x8x32xf32>
    %116 = vector.shape_cast %115 : vector<1x8x32xf32> to vector<8x32xf32>
    %117 = vector.shape_cast %105 : vector<8x32xf32> to vector<1x8x32xf32>
    tpu.vector_store %arg17[%c0_39, %c0_40, %c0_41], %117 {strides = array<i32>} : memref<2x8x32xf32, #tpu.memory_space<vmem>>, vector<1x8x32xf32>,
    %c0_42 = arith.constant 0 : index
    %c0_43 = arith.constant 0 : index
    %118 = vector.load %arg15[%c0_42, %c0_43] : memref<32x32xf32, #tpu.memory_space<vmem>>, vector<32x32xf32>
    %119 = arith.truncf %118 : vector<32x32xf32> to vector<32x32xbf16>
    %c0_44 = arith.constant 0 : index
    %c0_45 = arith.constant 0 : index
    %120 = vector.load %arg8[%c0_44, %c0_45] : memref<32x128xbf16, #tpu.memory_space<vmem>>, vector<32x128xbf16>
    %cst_46 = arith.constant dense<0.000000e+00> : vector<32x128xf32>
    %121 = tpu.matmul %119, %120, %cst_46 {dimension_numbers = #tpu.dot_dimension_numbers<[1], [0], [0], [1], [0, 0, 1, 1], [], []>} : vector<32x32xbf16>, vector<32x128xbf16>, vector<32x128xf32> -> vector<32x128xf32>
    %c0_47 = arith.constant 0 : index
    %c0_48 = arith.constant 0 : index
    %122 = vector.load %arg10[%c0_47, %c0_48] : memref<1x128xf32, #tpu.memory_space<vmem>>, vector<1x128xf32>
    %123 = vector.broadcast %122 : vector<1x128xf32> to vector<32x128xf32>
    %124 = arith.addf %121, %123 : vector<32x128xf32>
    %c0_49 = arith.constant 0 : index
    %c0_50 = arith.constant 0 : index
    %125 = vector.load %arg14[%c0_49, %c0_50] : memref<32x128xf32, #tpu.memory_space<vmem>>, vector<32x128xf32>
    tpu.vector_store %arg14[%c0_49, %c0_50], %124 {strides = array<i32>} : memref<32x128xf32, #tpu.memory_space<vmem>>, vector<32x128xf32>,
    %c0_51 = arith.constant 0 : index
    %c0_52 = arith.constant 0 : index
    %126 = vector.load %arg11[%c0_51, %c0_52] : memref<32x128xbf16, #tpu.memory_space<vmem>>, vector<32x128xbf16>
    %c1 = arith.constant 1 : index
    %c0_53 = arith.constant 0 : index
    %c0_54 = arith.constant 0 : index
    %127 = vector.load %arg16[%c1, %c0_53, %c0_54] : memref<2x8x128xf32, #tpu.memory_space<vmem>>, vector<1x8x128xf32>
    %128 = vector.shape_cast %127 : vector<1x8x128xf32> to vector<8x128xf32>
    %c1_55 = arith.constant 1 : index
    %c0_56 = arith.constant 0 : index
    %c0_57 = arith.constant 0 : index
    %129 = vector.load %arg17[%c1_55, %c0_56, %c0_57] : memref<2x8x32xf32, #tpu.memory_space<vmem>>, vector<1x8x32xf32>
    %130 = vector.shape_cast %129 : vector<1x8x32xf32> to vector<8x32xf32>
    %c0_i32_58 = arith.constant 0 : i32
    %c8_i32_59 = arith.constant 8 : i32
    %131 = arith.muli %c0_i32_58, %c8_i32_59 : i32
    %132 = tpu.assume_multiple %131, 8 : i32
    %133 = arith.index_cast %132 : i32 to index
    %c0_60 = arith.constant 0 : index
    %134 = vector.load %arg14[%133, %c0_60] : memref<32x128xf32, #tpu.memory_space<vmem>>, vector<8x128xf32>
    %135 = arith.addf %134, %128 : vector<8x128xf32>
    %136 = arith.negf %135 : vector<8x128xf32>
    %137 = math.exp %136 : vector<8x128xf32>
    %cst_61 = arith.constant 1.000000e+00 : f32
    %138 = vector.broadcast %cst_61 : f32 to vector<8x128xf32>
    %139 = arith.addf %138, %137 : vector<8x128xf32>
    %140 = arith.divf %138, %139 : vector<8x128xf32>
    %141 = math.tanh %135 : vector<8x128xf32>
    %142 = vector.extract_strided_slice %140 {offsets = [0, 0], sizes = [8, 32], strides = [1, 1]} : vector<8x128xf32> to vector<8x32xf32>
    %143 = vector.extract_strided_slice %140 {offsets = [0, 32], sizes = [8, 32], strides = [1, 1]} : vector<8x128xf32> to vector<8x32xf32>
    %144 = vector.extract_strided_slice %141 {offsets = [0, 64], sizes = [8, 32], strides = [1, 1]} : vector<8x128xf32> to vector<8x32xf32>
    %145 = vector.extract_strided_slice %140 {offsets = [0, 96], sizes = [8, 32], strides = [1, 1]} : vector<8x128xf32> to vector<8x32xf32>
    %146 = arith.mulf %143, %130 : vector<8x32xf32>
    %147 = arith.mulf %142, %144 : vector<8x32xf32>
    %148 = arith.addf %146, %147 : vector<8x32xf32>
    %149 = math.tanh %148 : vector<8x32xf32>
    %150 = arith.mulf %145, %149 : vector<8x32xf32>
    %151 = arith.index_cast %132 : i32 to index
    %c0_62 = arith.constant 0 : index
    %152 = vector.load %arg15[%151, %c0_62] : memref<32x32xf32, #tpu.memory_space<vmem>>, vector<8x32xf32>
    tpu.vector_store %arg15[%151, %c0_62], %150 {strides = array<i32>} : memref<32x32xf32, #tpu.memory_space<vmem>>, vector<8x32xf32>,
    %153 = arith.truncf %150 : vector<8x32xf32> to vector<8x32xbf16>
    %cst_63 = arith.constant dense<0.000000e+00> : vector<8x128xf32>
    %154 = tpu.matmul %153, %126, %cst_63 {dimension_numbers = #tpu.dot_dimension_numbers<[1], [0], [0], [1], [0, 0, 1, 1], [], []>} : vector<8x32xbf16>, vector<32x128xbf16>, vector<8x128xf32> -> vector<8x128xf32>
    %c1_i32_64 = arith.constant 1 : i32
    %c8_i32_65 = arith.constant 8 : i32
    %155 = arith.muli %c1_i32_64, %c8_i32_65 : i32
    %156 = tpu.assume_multiple %155, 8 : i32
    %157 = arith.index_cast %156 : i32 to index
    %c0_66 = arith.constant 0 : index
    %158 = vector.load %arg14[%157, %c0_66] : memref<32x128xf32, #tpu.memory_space<vmem>>, vector<8x128xf32>
    %159 = arith.addf %158, %154 : vector<8x128xf32>
    %160 = arith.negf %159 : vector<8x128xf32>
    %161 = math.exp %160 : vector<8x128xf32>
    %cst_67 = arith.constant 1.000000e+00 : f32
    %162 = vector.broadcast %cst_67 : f32 to vector<8x128xf32>
    %163 = arith.addf %162, %161 : vector<8x128xf32>
    %164 = arith.divf %162, %163 : vector<8x128xf32>
    %165 = math.tanh %159 : vector<8x128xf32>
    %166 = vector.extract_strided_slice %164 {offsets = [0, 0], sizes = [8, 32], strides = [1, 1]} : vector<8x128xf32> to vector<8x32xf32>
    %167 = vector.extract_strided_slice %164 {offsets = [0, 32], sizes = [8, 32], strides = [1, 1]} : vector<8x128xf32> to vector<8x32xf32>
    %168 = vector.extract_strided_slice %165 {offsets = [0, 64], sizes = [8, 32], strides = [1, 1]} : vector<8x128xf32> to vector<8x32xf32>
    %169 = vector.extract_strided_slice %164 {offsets = [0, 96], sizes = [8, 32], strides = [1, 1]} : vector<8x128xf32> to vector<8x32xf32>
    %170 = arith.mulf %167, %148 : vector<8x32xf32>
    %171 = arith.mulf %166, %168 : vector<8x32xf32>
    %172 = arith.addf %170, %171 : vector<8x32xf32>
    %173 = math.tanh %172 : vector<8x32xf32>
    %174 = arith.mulf %169, %173 : vector<8x32xf32>
    %175 = arith.index_cast %156 : i32 to index
    %c0_68 = arith.constant 0 : index
    %176 = vector.load %arg15[%175, %c0_68] : memref<32x32xf32, #tpu.memory_space<vmem>>, vector<8x32xf32>
    tpu.vector_store %arg15[%175, %c0_68], %174 {strides = array<i32>} : memref<32x32xf32, #tpu.memory_space<vmem>>, vector<8x32xf32>,
    %177 = arith.truncf %174 : vector<8x32xf32> to vector<8x32xbf16>
    %cst_69 = arith.constant dense<0.000000e+00> : vector<8x128xf32>
    %178 = tpu.matmul %177, %126, %cst_69 {dimension_numbers = #tpu.dot_dimension_numbers<[1], [0], [0], [1], [0, 0, 1, 1], [], []>} : vector<8x32xbf16>, vector<32x128xbf16>, vector<8x128xf32> -> vector<8x128xf32>
    %c2_i32_70 = arith.constant 2 : i32
    %c8_i32_71 = arith.constant 8 : i32
    %179 = arith.muli %c2_i32_70, %c8_i32_71 : i32
    %180 = tpu.assume_multiple %179, 8 : i32
    %181 = arith.index_cast %180 : i32 to index
    %c0_72 = arith.constant 0 : index
    %182 = vector.load %arg14[%181, %c0_72] : memref<32x128xf32, #tpu.memory_space<vmem>>, vector<8x128xf32>
    %183 = arith.addf %182, %178 : vector<8x128xf32>
    %184 = arith.negf %183 : vector<8x128xf32>
    %185 = math.exp %184 : vector<8x128xf32>
    %cst_73 = arith.constant 1.000000e+00 : f32
    %186 = vector.broadcast %cst_73 : f32 to vector<8x128xf32>
    %187 = arith.addf %186, %185 : vector<8x128xf32>
    %188 = arith.divf %186, %187 : vector<8x128xf32>
    %189 = math.tanh %183 : vector<8x128xf32>
    %190 = vector.extract_strided_slice %188 {offsets = [0, 0], sizes = [8, 32], strides = [1, 1]} : vector<8x128xf32> to vector<8x32xf32>
    %191 = vector.extract_strided_slice %188 {offsets = [0, 32], sizes = [8, 32], strides = [1, 1]} : vector<8x128xf32> to vector<8x32xf32>
    %192 = vector.extract_strided_slice %189 {offsets = [0, 64], sizes = [8, 32], strides = [1, 1]} : vector<8x128xf32> to vector<8x32xf32>
    %193 = vector.extract_strided_slice %188 {offsets = [0, 96], sizes = [8, 32], strides = [1, 1]} : vector<8x128xf32> to vector<8x32xf32>
    %194 = arith.mulf %191, %172 : vector<8x32xf32>
    %195 = arith.mulf %190, %192 : vector<8x32xf32>
    %196 = arith.addf %194, %195 : vector<8x32xf32>
    %197 = math.tanh %196 : vector<8x32xf32>
    %198 = arith.mulf %193, %197 : vector<8x32xf32>
    %199 = arith.index_cast %180 : i32 to index
    %c0_74 = arith.constant 0 : index
    %200 = vector.load %arg15[%199, %c0_74] : memref<32x32xf32, #tpu.memory_space<vmem>>, vector<8x32xf32>
    tpu.vector_store %arg15[%199, %c0_74], %198 {strides = array<i32>} : memref<32x32xf32, #tpu.memory_space<vmem>>, vector<8x32xf32>,
    %201 = arith.truncf %198 : vector<8x32xf32> to vector<8x32xbf16>
    %cst_75 = arith.constant dense<0.000000e+00> : vector<8x128xf32>
    %202 = tpu.matmul %201, %126, %cst_75 {dimension_numbers = #tpu.dot_dimension_numbers<[1], [0], [0], [1], [0, 0, 1, 1], [], []>} : vector<8x32xbf16>, vector<32x128xbf16>, vector<8x128xf32> -> vector<8x128xf32>
    %c3_i32_76 = arith.constant 3 : i32
    %c8_i32_77 = arith.constant 8 : i32
    %203 = arith.muli %c3_i32_76, %c8_i32_77 : i32
    %204 = tpu.assume_multiple %203, 8 : i32
    %205 = arith.index_cast %204 : i32 to index
    %c0_78 = arith.constant 0 : index
    %206 = vector.load %arg14[%205, %c0_78] : memref<32x128xf32, #tpu.memory_space<vmem>>, vector<8x128xf32>
    %207 = arith.addf %206, %202 : vector<8x128xf32>
    %208 = arith.negf %207 : vector<8x128xf32>
    %209 = math.exp %208 : vector<8x128xf32>
    %cst_79 = arith.constant 1.000000e+00 : f32
    %210 = vector.broadcast %cst_79 : f32 to vector<8x128xf32>
    %211 = arith.addf %210, %209 : vector<8x128xf32>
    %212 = arith.divf %210, %211 : vector<8x128xf32>
    %213 = math.tanh %207 : vector<8x128xf32>
    %214 = vector.extract_strided_slice %212 {offsets = [0, 0], sizes = [8, 32], strides = [1, 1]} : vector<8x128xf32> to vector<8x32xf32>
    %215 = vector.extract_strided_slice %212 {offsets = [0, 32], sizes = [8, 32], strides = [1, 1]} : vector<8x128xf32> to vector<8x32xf32>
    %216 = vector.extract_strided_slice %213 {offsets = [0, 64], sizes = [8, 32], strides = [1, 1]} : vector<8x128xf32> to vector<8x32xf32>
    %217 = vector.extract_strided_slice %212 {offsets = [0, 96], sizes = [8, 32], strides = [1, 1]} : vector<8x128xf32> to vector<8x32xf32>
    %218 = arith.mulf %215, %196 : vector<8x32xf32>
    %219 = arith.mulf %214, %216 : vector<8x32xf32>
    %220 = arith.addf %218, %219 : vector<8x32xf32>
    %221 = math.tanh %220 : vector<8x32xf32>
    %222 = arith.mulf %217, %221 : vector<8x32xf32>
    %223 = arith.index_cast %204 : i32 to index
    %c0_80 = arith.constant 0 : index
    %224 = vector.load %arg15[%223, %c0_80] : memref<32x32xf32, #tpu.memory_space<vmem>>, vector<8x32xf32>
    tpu.vector_store %arg15[%223, %c0_80], %222 {strides = array<i32>} : memref<32x32xf32, #tpu.memory_space<vmem>>, vector<8x32xf32>,
    %225 = arith.truncf %222 : vector<8x32xf32> to vector<8x32xbf16>
    %cst_81 = arith.constant dense<0.000000e+00> : vector<8x128xf32>
    %226 = tpu.matmul %225, %126, %cst_81 {dimension_numbers = #tpu.dot_dimension_numbers<[1], [0], [0], [1], [0, 0, 1, 1], [], []>} : vector<8x32xbf16>, vector<32x128xbf16>, vector<8x128xf32> -> vector<8x128xf32>
    %c4_i32_82 = arith.constant 4 : i32
    %c1_83 = arith.constant 1 : index
    %c0_84 = arith.constant 0 : index
    %c0_85 = arith.constant 0 : index
    %227 = vector.load %arg16[%c1_83, %c0_84, %c0_85] : memref<2x8x128xf32, #tpu.memory_space<vmem>>, vector<1x8x128xf32>
    %228 = vector.shape_cast %227 : vector<1x8x128xf32> to vector<8x128xf32>
    %229 = vector.shape_cast %226 : vector<8x128xf32> to vector<1x8x128xf32>
    tpu.vector_store %arg16[%c1_83, %c0_84, %c0_85], %229 {strides = array<i32>} : memref<2x8x128xf32, #tpu.memory_space<vmem>>, vector<1x8x128xf32>,
    %c1_86 = arith.constant 1 : index
    %c0_87 = arith.constant 0 : index
    %c0_88 = arith.constant 0 : index
    %230 = vector.load %arg17[%c1_86, %c0_87, %c0_88] : memref<2x8x32xf32, #tpu.memory_space<vmem>>, vector<1x8x32xf32>
    %231 = vector.shape_cast %230 : vector<1x8x32xf32> to vector<8x32xf32>
    %232 = vector.shape_cast %220 : vector<8x32xf32> to vector<1x8x32xf32>
    tpu.vector_store %arg17[%c1_86, %c0_87, %c0_88], %232 {strides = array<i32>} : memref<2x8x32xf32, #tpu.memory_space<vmem>>, vector<1x8x32xf32>,
    %c0_89 = arith.constant 0 : index
    %c0_90 = arith.constant 0 : index
    %233 = vector.load %arg15[%c0_89, %c0_90] : memref<32x32xf32, #tpu.memory_space<vmem>>, vector<32x32xf32>
    %234 = arith.truncf %233 : vector<32x32xf32> to vector<32x32xbf16>
    %c0_91 = arith.constant 0 : index
    %c0_92 = arith.constant 0 : index
    %235 = vector.load %arg12[%c0_91, %c0_92] : memref<32x128xbf16, #tpu.memory_space<vmem>>, vector<32x128xbf16>
    %cst_93 = arith.constant dense<0.000000e+00> : vector<32x128xf32>
    %236 = tpu.matmul %234, %235, %cst_93 {dimension_numbers = #tpu.dot_dimension_numbers<[1], [0], [0], [1], [0, 0, 1, 1], [], []>} : vector<32x32xbf16>, vector<32x128xbf16>, vector<32x128xf32> -> vector<32x128xf32>
    %c0_94 = arith.constant 0 : index
    %c0_95 = arith.constant 0 : index
    %237 = vector.load %arg13[%c0_94, %c0_95] : memref<32x128xf32, #tpu.memory_space<vmem>>, vector<32x128xf32>
    tpu.vector_store %arg13[%c0_94, %c0_95], %236 {strides = array<i32>} : memref<32x128xf32, #tpu.memory_space<vmem>>, vector<32x128xf32>,
    return
  }
  func.func @transform_0(%arg0: i32) -> (i32, i32) {
    %c0_i32 = arith.constant 0 : i32
    %c0_i32_0 = arith.constant 0 : i32
    return %arg0, %c0_i32 : i32, i32
  }
  func.func @transform_1(%arg0: i32) -> (i32, i32, i32) {
    %c0_i32 = arith.constant 0 : i32
    %c0_i32_0 = arith.constant 0 : i32
    %c0_i32_1 = arith.constant 0 : i32
    %c0_i32_2 = arith.constant 0 : i32
    return %c0_i32, %c0_i32_0, %c0_i32_1 : i32, i32, i32
  }
  func.func @transform_2(%arg0: i32) -> (i32, i32, i32) {
    %c0_i32 = arith.constant 0 : i32
    %c0_i32_0 = arith.constant 0 : i32
    %c0_i32_1 = arith.constant 0 : i32
    %c0_i32_2 = arith.constant 0 : i32
    return %c0_i32, %c0_i32_0, %c0_i32_1 : i32, i32, i32
  }
  func.func @transform_3(%arg0: i32) -> (i32, i32) {
    %c0_i32 = arith.constant 0 : i32
    %c0_i32_0 = arith.constant 0 : i32
    %c0_i32_1 = arith.constant 0 : i32
    return %c0_i32, %c0_i32_0 : i32, i32
  }
  func.func @transform_4(%arg0: i32) -> (i32, i32) {
    %c0_i32 = arith.constant 0 : i32
    %c0_i32_0 = arith.constant 0 : i32
    %c0_i32_1 = arith.constant 0 : i32
    return %c0_i32, %c0_i32_0 : i32, i32
  }
  func.func @transform_5(%arg0: i32) -> (i32, i32) {
    %c0_i32 = arith.constant 0 : i32
    %c0_i32_0 = arith.constant 0 : i32
    %c0_i32_1 = arith.constant 0 : i32
    return %c0_i32, %c0_i32_0 : i32, i32
  }
  func.func @transform_6(%arg0: i32) -> (i32, i32) {
    %c0_i32 = arith.constant 0 : i32
    %c0_i32_0 = arith.constant 0 : i32
    %c0_i32_1 = arith.constant 0 : i32
    return %c0_i32, %c0_i32_0 : i32, i32
  }
  func.func @transform_7(%arg0: i32) -> (i32, i32) {
    %c0_i32 = arith.constant 0 : i32
    %c0_i32_0 = arith.constant 0 : i32
    %c0_i32_1 = arith.constant 0 : i32
    return %c0_i32, %c0_i32_0 : i32, i32
  }
  func.func @transform_8(%arg0: i32) -> (i32, i32) {
    %c0_i32 = arith.constant 0 : i32
    %c0_i32_0 = arith.constant 0 : i32
    %c0_i32_1 = arith.constant 0 : i32
    return %c0_i32, %c0_i32_0 : i32, i32
  }
  func.func @transform_9(%arg0: i32) -> (i32, i32) {
    %c0_i32 = arith.constant 0 : i32
    %c0_i32_0 = arith.constant 0 : i32
    %c0_i32_1 = arith.constant 0 : i32
    return %c0_i32, %c0_i32_0 : i32, i32
  }
  func.func @transform_10(%arg0: i32) -> (i32, i32) {
    %c0_i32 = arith.constant 0 : i32
    %c0_i32_0 = arith.constant 0 : i32
    %c0_i32_1 = arith.constant 0 : i32
    return %c0_i32, %c0_i32_0 : i32, i32
  }
  func.func @transform_11(%arg0: i32) -> (i32, i32) {
    %c0_i32 = arith.constant 0 : i32
    %c0_i32_0 = arith.constant 0 : i32
    %c0_i32_1 = arith.constant 0 : i32
    return %c0_i32, %c0_i32_0 : i32, i32
  }
  func.func @transform_12(%arg0: i32) -> (i32, i32) {
    %c0_i32 = arith.constant 0 : i32
    %c0_i32_0 = arith.constant 0 : i32
    return %arg0, %c0_i32 : i32, i32
  }
}

</mosaic_0001>

<llo_original>
// kernel: tpu_custom_call.1
$region0: #{tpu_custom_call.1}
  #allocation0 [shape = 'u32[]', space=smem, size = 0x4, offset = 0x4, fixed_abs, tag = 'smem constant byte address 0x4 - core index']
  #allocation1 [shape = 'u32[144,128]{1,0:T(1,128)}', space=vmem, size = 0x12000, scoped, tag = 'internal scratch']
  #allocation2 [shape = 'f32[32,128]{1,0:T(8,128)}', space=vmem, size = 0x4000, scoped, tag = 'scratch operand']
  #allocation3 [shape = 'f32[32,32]{1,0:T(8,128)}', space=vmem, size = 0x4000, scoped, tag = 'scratch operand']
  #allocation4 [shape = 'f32[2,8,128]{2,1,0:T(8,128)}', space=vmem, size = 0x2000, scoped, tag = 'scratch operand']
  #allocation5 [shape = 'f32[2,8,32]{2,1,0:T(8,128)}', space=vmem, size = 0x2000, scoped, tag = 'scratch operand']
  %s0 = inlined_call_operand.vmem [shape: f32[64,16], index: 0, kind: input, shape index: {}]
  %s1 = inlined_call_operand.vmem [shape: f32[2,8,8], index: 1, kind: input, shape index: {}]
  %s2 = inlined_call_operand.vmem [shape: f32[2,8,32], index: 2, kind: input, shape index: {}]
  %s3 = inlined_call_operand.hbm [shape: bf16[16,128], index: 3, kind: input, shape index: {}]
  %s4 = inlined_call_operand.hbm [shape: f32[8,128], index: 4, kind: input, shape index: {}]
  %s5 = inlined_call_operand.vmem [shape: f32[1,128], index: 5, kind: input, shape index: {}]
  %s6 = inlined_call_operand.vmem [shape: bf16[32,128], index: 6, kind: input, shape index: {}]
  %s7 = inlined_call_operand.vmem [shape: bf16[32,128], index: 7, kind: input, shape index: {}]
  %s8 = inlined_call_operand.vmem [shape: f32[8,128], index: 8, kind: input, shape index: {}]
  %s9 = inlined_call_operand.vmem [shape: f32[1,128], index: 9, kind: input, shape index: {}]
  %s10 = inlined_call_operand.vmem [shape: bf16[32,128], index: 10, kind: input, shape index: {}]
  %s11 = inlined_call_operand.vmem [shape: bf16[32,128], index: 11, kind: input, shape index: {}]
  %s12 = inlined_call_operand.hbm [shape: f32[64,128], index: 12, kind: output, shape index: {}]
  %s13 = sld [smem:[#allocation0]]
  $region93: #{tpu_custom_call.1} parent=0
    _
  %s15 = ssub.s32 1, %s13
  %s16 = scalar_select 0, %s15, %s13
  $region1: #{tpu_custom_call.1} parent=0
    #allocation6 [shape = 'u8[4096]{0}', space=vmem, size = 0x1000, scoped, tag = 'input window, operand 3, single buffered']
    #allocation7 [shape = 's32[2]{0}', space=sflag, size = 0x8, scoped, tag = 'scoped memory for tpu_custom_call.1']
    #allocation8 [shape = 's32[2]{0}', space=sflag, size = 0x8, scoped, tag = 'scoped memory for tpu_custom_call.1']
    #allocation9 [shape = 'u8[4096]{0}', space=vmem, size = 0x1000, scoped, tag = 'input window, operand 4, single buffered']
    #allocation10 [shape = 's32[1]{0}', space=sflag, size = 0x4, scoped, tag = 'scoped memory for tpu_custom_call.1']
    #allocation11 [shape = 'u8[32768]{0}', space=vmem, size = 0x8000, scoped, tag = 'output window, operand 0']
    %17 = vsyncpa [#allocation7], 0
    %18 = vsyncpa [#allocation10], 0
    %19 = vsyncpa [#allocation8], 0
    %s20 = scalar_lea.sflag [#allocation8], 1
    %21 = vsyncpa %s20, 0
    loop: start=0, step=1, limit=4
    $region2: #{tpu_custom_call.1} parent=1 // loop_pre_header
      _
    $region3: #{tpu_custom_call.1} parent=1 // loop_header
      %s23 = sphi 0, %s27
      %p24 = scmp.ge.s32.totalorder %s23, 4
      %s33 = sphi 0, %s35
      %s36 = sphi 0, %s33
      %s37 = sphi 0, %s36
      %s53 = sphi 0, %s37
      %s57 = sphi 0, %s57
      %s59 = sphi 0, %s57
      %s60 = sphi 0, %s59
      %s74 = sphi 0, %s60
      %s78 = sphi 0, %s78
      %s80 = sphi 0, %s78
      %s81 = sphi 0, %s80
      %s95 = sphi 0, %s81
      %s99 = sphi 0, %s99
      %s101 = sphi 0, %s99
      %s102 = sphi 0, %s101
      %s116 = sphi 0, %s102
      %s120 = sphi 0, %s120
      %s122 = sphi 0, %s120
      %s123 = sphi 0, %s122
      %s137 = sphi 0, %s123
      %s141 = sphi 0, %s141
      %s143 = sphi 0, %s141
      %s144 = sphi 0, %s143
      %s158 = sphi 0, %s144
      %s162 = sphi 0, %s162
      %s164 = sphi 0, %s162
      %s165 = sphi 0, %s164
      %s179 = sphi 0, %s165
      %s183 = sphi 0, %s183
      %s185 = sphi 0, %s183
      %s186 = sphi 0, %s185
      %s200 = sphi 0, %s186
      %s204 = sphi 0, %s204
      %s206 = sphi 0, %s204
      %s207 = sphi 0, %s206
      %s221 = sphi 0, %s207
      %s225 = sphi 0, %s225
      %s227 = sphi 0, %s225
      %s228 = sphi 0, %s227
      %s242 = sphi 0, %s228
      %s246 = sphi 0, %s246
      %s248 = sphi 0, %s246
      %s249 = sphi 0, %s248
      %s263 = sphi 0, %s249
      %s267 = sphi 0, %s267
      %s269 = sphi 0, %s267
      %s270 = sphi 0, %s269
      %s284 = sphi 0, %s270
      %s290 = sphi 0, %s292
      %s293 = sphi 0, %s290
      %s294 = sphi 0, %s293
      %s310 = sphi 0, %s294
    $region4: #{tpu_custom_call.1} parent=1 // loop_header_branch
      %26 = sbr.rel (%p24) target = $region8
    $region5: #{tpu_custom_call.1} parent=1 // loop_body
      %s28 = ssub.s32 %s23, 1
      %s29 = ssub.s32 %s23, 2
      %s30 = sadd.s32 %s23, 1
      %s31 = ssub.s32 %s23, %s30
      %p32 = scmp.eq.s32.totalorder %s31, 0
      %s34 = sadd.s32 %s33, 1
      %s35 = scalar_select %p32, %s33, %s34
      %p38 = pneg %p32
      %p39 = scmp.eq.s32.totalorder %s23, 1
      %p40 = por %p38, %p39
      %p41 = scmp.ne.s32.totalorder %s33, %s36
      %p42 = scmp.eq.s32.totalorder %s23, 0
      %p43 = por %p41, %p42
      %p44 = scmp.ne.s32.totalorder %s33, %s36
      %p45 = scmp.eq.s32.totalorder %s28, 1
      %p46 = por %p44, %p45
      %p47 = scmp.ne.s32.totalorder %s36, %s37
      %p48 = scmp.eq.s32.totalorder %s28, 0
      %p49 = por %p47, %p48
      %p50 = scmp.ne.s32.totalorder %s36, %s37
      %p51 = scmp.eq.s32.totalorder %s29, 1
      %p52 = por %p50, %p51
      %p54 = scmp.ne.s32.totalorder %s37, %s53
      %p55 = scmp.eq.s32.totalorder %s29, 0
      %p56 = por %p54, %p55
      %s58 = sadd.s32 %s57, 1
      %p61 = scmp.eq.s32.totalorder %s23, 1
      %p62 = scmp.ne.s32.totalorder %s57, %s59
      %p63 = scmp.eq.s32.totalorder %s23, 0
      %p64 = por %p62, %p63
      %p65 = scmp.ne.s32.totalorder %s57, %s59
      %p66 = scmp.eq.s32.totalorder %s28, 1
      %p67 = por %p65, %p66
      %p68 = scmp.ne.s32.totalorder %s59, %s60
      %p69 = scmp.eq.s32.totalorder %s28, 0
      %p70 = por %p68, %p69
      %p71 = scmp.ne.s32.totalorder %s59, %s60
      %p72 = scmp.eq.s32.totalorder %s29, 1
      %p73 = por %p71, %p72
      %p75 = scmp.ne.s32.totalorder %s60, %s74
      %p76 = scmp.eq.s32.totalorder %s29, 0
      %p77 = por %p75, %p76
      %s79 = sadd.s32 %s78, 1
      %p82 = scmp.eq.s32.totalorder %s23, 1
      %p83 = scmp.ne.s32.totalorder %s78, %s80
      %p84 = scmp.eq.s32.totalorder %s23, 0
      %p85 = por %p83, %p84
      %p86 = scmp.ne.s32.totalorder %s78, %s80
      %p87 = scmp.eq.s32.totalorder %s28, 1
      %p88 = por %p86, %p87
      %p89 = scmp.ne.s32.totalorder %s80, %s81
      %p90 = scmp.eq.s32.totalorder %s28, 0
      %p91 = por %p89, %p90
      %p92 = scmp.ne.s32.totalorder %s80, %s81
      %p93 = scmp.eq.s32.totalorder %s29, 1
      %p94 = por %p92, %p93
      %p96 = scmp.ne.s32.totalorder %s81, %s95
      %p97 = scmp.eq.s32.totalorder %s29, 0
      %p98 = por %p96, %p97
      %s100 = sadd.s32 %s99, 1
      %p103 = scmp.eq.s32.totalorder %s23, 1
      %p104 = scmp.ne.s32.totalorder %s99, %s101
      %p105 = scmp.eq.s32.totalorder %s23, 0
      %p106 = por %p104, %p105
      %p107 = scmp.ne.s32.totalorder %s99, %s101
      %p108 = scmp.eq.s32.totalorder %s28, 1
      %p109 = por %p107, %p108
      %p110 = scmp.ne.s32.totalorder %s101, %s102
      %p111 = scmp.eq.s32.totalorder %s28, 0
      %p112 = por %p110, %p111
      %p113 = scmp.ne.s32.totalorder %s101, %s102
      %p114 = scmp.eq.s32.totalorder %s29, 1
      %p115 = por %p113, %p114
      %p117 = scmp.ne.s32.totalorder %s102, %s116
      %p118 = scmp.eq.s32.totalorder %s29, 0
      %p119 = por %p117, %p118
      %s121 = sadd.s32 %s120, 1
      %p124 = scmp.eq.s32.totalorder %s23, 1
      %p125 = scmp.ne.s32.totalorder %s120, %s122
      %p126 = scmp.eq.s32.totalorder %s23, 0
      %p127 = por %p125, %p126
      %p128 = scmp.ne.s32.totalorder %s120, %s122
      %p129 = scmp.eq.s32.totalorder %s28, 1
      %p130 = por %p128, %p129
      %p131 = scmp.ne.s32.totalorder %s122, %s123
      %p132 = scmp.eq.s32.totalorder %s28, 0
      %p133 = por %p131, %p132
      %p134 = scmp.ne.s32.totalorder %s122, %s123
      %p135 = scmp.eq.s32.totalorder %s29, 1
      %p136 = por %p134, %p135
      %p138 = scmp.ne.s32.totalorder %s123, %s137
      %p139 = scmp.eq.s32.totalorder %s29, 0
      %p140 = por %p138, %p139
      %s142 = sadd.s32 %s141, 1
      %p145 = scmp.eq.s32.totalorder %s23, 1
      %p146 = scmp.ne.s32.totalorder %s141, %s143
      %p147 = scmp.eq.s32.totalorder %s23, 0
      %p148 = por %p146, %p147
      %p149 = scmp.ne.s32.totalorder %s141, %s143
      %p150 = scmp.eq.s32.totalorder %s28, 1
      %p151 = por %p149, %p150
      %p152 = scmp.ne.s32.totalorder %s143, %s144
      %p153 = scmp.eq.s32.totalorder %s28, 0
      %p154 = por %p152, %p153
      %p155 = scmp.ne.s32.totalorder %s143, %s144
      %p156 = scmp.eq.s32.totalorder %s29, 1
      %p157 = por %p155, %p156
      %p159 = scmp.ne.s32.totalorder %s144, %s158
      %p160 = scmp.eq.s32.totalorder %s29, 0
      %p161 = por %p159, %p160
      %s163 = sadd.s32 %s162, 1
      %p166 = scmp.eq.s32.totalorder %s23, 1
      %p167 = scmp.ne.s32.totalorder %s162, %s164
      %p168 = scmp.eq.s32.totalorder %s23, 0
      %p169 = por %p167, %p168
      %p170 = scmp.ne.s32.totalorder %s162, %s164
      %p171 = scmp.eq.s32.totalorder %s28, 1
      %p172 = por %p170, %p171
      %p173 = scmp.ne.s32.totalorder %s164, %s165
      %p174 = scmp.eq.s32.totalorder %s28, 0
      %p175 = por %p173, %p174
      %p176 = scmp.ne.s32.totalorder %s164, %s165
      %p177 = scmp.eq.s32.totalorder %s29, 1
      %p178 = por %p176, %p177
      %p180 = scmp.ne.s32.totalorder %s165, %s179
      %p181 = scmp.eq.s32.totalorder %s29, 0
      %p182 = por %p180, %p181
      %s184 = sadd.s32 %s183, 1
      %p187 = scmp.eq.s32.totalorder %s23, 1
      %p188 = scmp.ne.s32.totalorder %s183, %s185
      %p189 = scmp.eq.s32.totalorder %s23, 0
      %p190 = por %p188, %p189
      %p191 = scmp.ne.s32.totalorder %s183, %s185
      %p192 = scmp.eq.s32.totalorder %s28, 1
      %p193 = por %p191, %p192
      %p194 = scmp.ne.s32.totalorder %s185, %s186
      %p195 = scmp.eq.s32.totalorder %s28, 0
      %p196 = por %p194, %p195
      %p197 = scmp.ne.s32.totalorder %s185, %s186
      %p198 = scmp.eq.s32.totalorder %s29, 1
      %p199 = por %p197, %p198
      %p201 = scmp.ne.s32.totalorder %s186, %s200
      %p202 = scmp.eq.s32.totalorder %s29, 0
      %p203 = por %p201, %p202
      %s205 = sadd.s32 %s204, 1
      %p208 = scmp.eq.s32.totalorder %s23, 1
      %p209 = scmp.ne.s32.totalorder %s204, %s206
      %p210 = scmp.eq.s32.totalorder %s23, 0
      %p211 = por %p209, %p210
      %p212 = scmp.ne.s32.totalorder %s204, %s206
      %p213 = scmp.eq.s32.totalorder %s28, 1
      %p214 = por %p212, %p213
      %p215 = scmp.ne.s32.totalorder %s206, %s207
      %p216 = scmp.eq.s32.totalorder %s28, 0
      %p217 = por %p215, %p216
      %p218 = scmp.ne.s32.totalorder %s206, %s207
      %p219 = scmp.eq.s32.totalorder %s29, 1
      %p220 = por %p218, %p219
      %p222 = scmp.ne.s32.totalorder %s207, %s221
      %p223 = scmp.eq.s32.totalorder %s29, 0
      %p224 = por %p222, %p223
      %s226 = sadd.s32 %s225, 1
      %p229 = scmp.eq.s32.totalorder %s23, 1
      %p230 = scmp.ne.s32.totalorder %s225, %s227
      %p231 = scmp.eq.s32.totalorder %s23, 0
      %p232 = por %p230, %p231
      %p233 = scmp.ne.s32.totalorder %s225, %s227
      %p234 = scmp.eq.s32.totalorder %s28, 1
      %p235 = por %p233, %p234
      %p236 = scmp.ne.s32.totalorder %s227, %s228
      %p237 = scmp.eq.s32.totalorder %s28, 0
      %p238 = por %p236, %p237
      %p239 = scmp.ne.s32.totalorder %s227, %s228
      %p240 = scmp.eq.s32.totalorder %s29, 1
      %p241 = por %p239, %p240
      %p243 = scmp.ne.s32.totalorder %s228, %s242
      %p244 = scmp.eq.s32.totalorder %s29, 0
      %p245 = por %p243, %p244
      %s247 = sadd.s32 %s246, 1
      %p250 = scmp.eq.s32.totalorder %s23, 1
      %p251 = scmp.ne.s32.totalorder %s246, %s248
      %p252 = scmp.eq.s32.totalorder %s23, 0
      %p253 = por %p251, %p252
      %p254 = scmp.ne.s32.totalorder %s246, %s248
      %p255 = scmp.eq.s32.totalorder %s28, 1
      %p256 = por %p254, %p255
      %p257 = scmp.ne.s32.totalorder %s248, %s249
      %p258 = scmp.eq.s32.totalorder %s28, 0
      %p259 = por %p257, %p258
      %p260 = scmp.ne.s32.totalorder %s248, %s249
      %p261 = scmp.eq.s32.totalorder %s29, 1
      %p262 = por %p260, %p261
      %p264 = scmp.ne.s32.totalorder %s249, %s263
      %p265 = scmp.eq.s32.totalorder %s29, 0
      %p266 = por %p264, %p265
      %s268 = sadd.s32 %s267, 1
      %p271 = scmp.eq.s32.totalorder %s23, 1
      %p272 = scmp.ne.s32.totalorder %s267, %s269
      %p273 = scmp.eq.s32.totalorder %s23, 0
      %p274 = por %p272, %p273
      %p275 = scmp.ne.s32.totalorder %s267, %s269
      %p276 = scmp.eq.s32.totalorder %s28, 1
      %p277 = por %p275, %p276
      %p278 = scmp.ne.s32.totalorder %s269, %s270
      %p279 = scmp.eq.s32.totalorder %s28, 0
      %p280 = por %p278, %p279
      %p281 = scmp.ne.s32.totalorder %s269, %s270
      %p282 = scmp.eq.s32.totalorder %s29, 1
      %p283 = por %p281, %p282
      %p285 = scmp.ne.s32.totalorder %s270, %s284
      %p286 = scmp.eq.s32.totalorder %s29, 0
      %p287 = por %p285, %p286
      %s288 = ssub.s32 %s23, %s30
      %p289 = scmp.eq.s32.totalorder %s288, 0
      %s291 = sadd.s32 %s290, 1
      %s292 = scalar_select %p289, %s290, %s291
      %p295 = pneg %p289
      %p296 = scmp.eq.s32.totalorder %s23, 1
      %p297 = por %p295, %p296
      %p298 = scmp.ne.s32.totalorder %s290, %s293
      %p299 = scmp.eq.s32.totalorder %s23, 0
      %p300 = por %p298, %p299
      %p301 = scmp.ne.s32.totalorder %s290, %s293
      %p302 = scmp.eq.s32.totalorder %s28, 1
      %p303 = por %p301, %p302
      %p304 = scmp.ne.s32.totalorder %s293, %s294
      %p305 = scmp.eq.s32.totalorder %s28, 0
      %p306 = por %p304, %p305
      %p307 = scmp.ne.s32.totalorder %s293, %s294
      %p308 = scmp.eq.s32.totalorder %s29, 1
      %p309 = por %p307, %p308
      %p311 = scmp.ne.s32.totalorder %s294, %s310
      %p312 = scmp.eq.s32.totalorder %s29, 0
      %p313 = por %p311, %p312
      %p314 = scmp.le.s32.totalorder 1, %s23
      %p315 = scmp.lt.s32.totalorder %s23, 3
      %p316 = pnand %p314, %p315
      %p317 = pneg %p316
      // Predicated region
      $region9: #{tpu_custom_call.1} parent=5 // pred_check
        _
      $region10: #{tpu_custom_call.1} parent=5 // pred_check_branch
        %319 = sbr.rel (%p316) target = $region12
      $region11: #{tpu_custom_call.1} parent=5 // pred_region
        %s320 = ssub.s32 %s23, 1
        // Predicated region
        $region13: #{tpu_custom_call.1} parent=11 // pred_check
          %p321 = pneg %p70
        $region14: #{tpu_custom_call.1} parent=11 // pred_check_branch
          %323 = sbr.rel (%p321) target = $region16
        $region15: #{tpu_custom_call.1} parent=11 // pred_region
          _
        $region16: #{tpu_custom_call.1} parent=11 // pred_fallthru
          _
        // Predicated region
        $region17: #{tpu_custom_call.1} parent=11 // pred_check
          %p324 = pneg %p91
        $region18: #{tpu_custom_call.1} parent=11 // pred_check_branch
          %326 = sbr.rel (%p324) target = $region20
        $region19: #{tpu_custom_call.1} parent=11 // pred_region
          _
        $region20: #{tpu_custom_call.1} parent=11 // pred_fallthru
          _
        // Predicated region
        $region21: #{tpu_custom_call.1} parent=11 // pred_check
          %p327 = pneg %p112
        $region22: #{tpu_custom_call.1} parent=11 // pred_check_branch
          %329 = sbr.rel (%p327) target = $region24
        $region23: #{tpu_custom_call.1} parent=11 // pred_region
          %s331 = ssub.s32 128, 128
          %332 = vsyncadd [#allocation7], %s331
          %s333 = sshll.u32 [#allocation6], 4
          %s334 = int_to_ptr.vmem [resolvable:$true] %s333
          %339 = dma.hbm_to_vmem [thread:$0]  %s3, 128, %s334, [#allocation7], 64, 64, 4
        $region24: #{tpu_custom_call.1} parent=11 // pred_fallthru
          _
        // Predicated region
        $region25: #{tpu_custom_call.1} parent=11 // pred_check
          %p340 = pneg %p133
        $region26: #{tpu_custom_call.1} parent=11 // pred_check_branch
          %342 = sbr.rel (%p340) target = $region28
        $region27: #{tpu_custom_call.1} parent=11 // pred_region
          %s344 = ssub.s32 128, 128
          %345 = vsyncadd [#allocation10], %s344
          %s347 = sshll.u32 [#allocation9], 4
          %s348 = int_to_ptr.vmem [resolvable:$true] %s347
          %350 = dma.hbm_to_vmem [thread:$0]  %s4, 128, %s348, [#allocation10]
        $region28: #{tpu_custom_call.1} parent=11 // pred_fallthru
          _
        // Predicated region
        $region29: #{tpu_custom_call.1} parent=11 // pred_check
          %p351 = pneg %p154
        $region30: #{tpu_custom_call.1} parent=11 // pred_check_branch
          %353 = sbr.rel (%p351) target = $region32
        $region31: #{tpu_custom_call.1} parent=11 // pred_region
          _
        $region32: #{tpu_custom_call.1} parent=11 // pred_fallthru
          _
        // Predicated region
        $region33: #{tpu_custom_call.1} parent=11 // pred_check
          %p354 = pneg %p175
        $region34: #{tpu_custom_call.1} parent=11 // pred_check_branch
          %356 = sbr.rel (%p354) target = $region36
        $region35: #{tpu_custom_call.1} parent=11 // pred_region
          _
        $region36: #{tpu_custom_call.1} parent=11 // pred_fallthru
          _
        // Predicated region
        $region37: #{tpu_custom_call.1} parent=11 // pred_check
          %p357 = pneg %p196
        $region38: #{tpu_custom_call.1} parent=11 // pred_check_branch
          %359 = sbr.rel (%p357) target = $region40
        $region39: #{tpu_custom_call.1} parent=11 // pred_region
          _
        $region40: #{tpu_custom_call.1} parent=11 // pred_fallthru
          _
        // Predicated region
        $region41: #{tpu_custom_call.1} parent=11 // pred_check
          %p360 = pneg %p217
        $region42: #{tpu_custom_call.1} parent=11 // pred_check_branch
          %362 = sbr.rel (%p360) target = $region44
        $region43: #{tpu_custom_call.1} parent=11 // pred_region
          _
        $region44: #{tpu_custom_call.1} parent=11 // pred_fallthru
          _
        // Predicated region
        $region45: #{tpu_custom_call.1} parent=11 // pred_check
          %p363 = pneg %p238
        $region46: #{tpu_custom_call.1} parent=11 // pred_check_branch
          %365 = sbr.rel (%p363) target = $region48
        $region47: #{tpu_custom_call.1} parent=11 // pred_region
          _
        $region48: #{tpu_custom_call.1} parent=11 // pred_fallthru
          _
        // Predicated region
        $region49: #{tpu_custom_call.1} parent=11 // pred_check
          %p366 = pneg %p259
        $region50: #{tpu_custom_call.1} parent=11 // pred_check_branch
          %368 = sbr.rel (%p366) target = $region52
        $region51: #{tpu_custom_call.1} parent=11 // pred_region
          _
        $region52: #{tpu_custom_call.1} parent=11 // pred_fallthru
          _
        // Predicated region
        $region53: #{tpu_custom_call.1} parent=11 // pred_check
          %p369 = pneg %p280
        $region54: #{tpu_custom_call.1} parent=11 // pred_check_branch
          %371 = sbr.rel (%p369) target = $region56
        $region55: #{tpu_custom_call.1} parent=11 // pred_region
          _
        $region56: #{tpu_custom_call.1} parent=11 // pred_fallthru
          _
      $region12: #{tpu_custom_call.1} parent=5 // pred_fallthru
        _
      %p372 = scmp.lt.s32.totalorder %s23, 2
      // Predicated region
      $region57: #{tpu_custom_call.1} parent=5 // pred_check
        %p373 = pneg %p372
      $region58: #{tpu_custom_call.1} parent=5 // pred_check_branch
        %375 = sbr.rel (%p373) target = $region60
      $region59: #{tpu_custom_call.1} parent=5 // pred_region
        // Predicated region
        $region61: #{tpu_custom_call.1} parent=59 // pred_check
          %p376 = pneg %p43
        $region62: #{tpu_custom_call.1} parent=59 // pred_check_branch
          %378 = sbr.rel (%p376) target = $region64
        $region63: #{tpu_custom_call.1} parent=59 // pred_region
          %s379 = smul.u32 4, %s23
          %p380 = scmp.lt.s32.totalorder %s379, 7
          %s381 = scalar_select %p380, %s379, 7
          %s382 = smul.addr %s381, 8
          %s383 = scalar_lea.vmem %s0, %s382
          %s384 = smul.u32 4, %s23
        $region64: #{tpu_custom_call.1} parent=59 // pred_fallthru
          _
      $region60: #{tpu_custom_call.1} parent=5 // pred_fallthru
        _
      %p385 = scmp.le.s32.totalorder 1, %s23
      %p386 = scmp.lt.s32.totalorder %s23, 3
      %p387 = pnand %p385, %p386
      %p388 = pneg %p387
      // Predicated region
      $region65: #{tpu_custom_call.1} parent=5 // pred_check
        _
      $region66: #{tpu_custom_call.1} parent=5 // pred_check_branch
        %390 = sbr.rel (%p387) target = $region68
      $region67: #{tpu_custom_call.1} parent=5 // pred_region
        %s391 = ssub.s32 %s23, 1
        // Predicated region
        $region69: #{tpu_custom_call.1} parent=67 // pred_check
          %p392 = pneg %p112
        $region70: #{tpu_custom_call.1} parent=67 // pred_check_branch
          %394 = sbr.rel (%p392) target = $region72
        $region71: #{tpu_custom_call.1} parent=67 // pred_region
          %395 = dma.done [#allocation7], 128
        $region72: #{tpu_custom_call.1} parent=67 // pred_fallthru
          _
        // Predicated region
        $region73: #{tpu_custom_call.1} parent=67 // pred_check
          %p396 = pneg %p133
        $region74: #{tpu_custom_call.1} parent=67 // pred_check_branch
          %398 = sbr.rel (%p396) target = $region76
        $region75: #{tpu_custom_call.1} parent=67 // pred_region
          %399 = dma.done [#allocation10], 128
        $region76: #{tpu_custom_call.1} parent=67 // pred_fallthru
          _
        %s400 = smul.u32 4, %s28
        %p401 = scmp.lt.s32.totalorder %s400, 7
        %s402 = scalar_select %p401, %s400, 7
        %s403 = smul.addr %s402, 8
        %s404 = scalar_lea.vmem %s0, %s403
        %p405 = pneg %p49
        %p406 = pneg %p46
        %p407 = pneg %p70
        %p408 = pneg %p67
        %p409 = pneg %p91
        %p410 = pneg %p88
        %p411 = pneg %p112
        %p412 = pneg %p109
        %p413 = pneg %p133
        %p414 = pneg %p130
        %p415 = pneg %p154
        %p416 = pneg %p151
        %p417 = pneg %p175
        %p418 = pneg %p172
        %p419 = pneg %p196
        %p420 = pneg %p193
        %p421 = pneg %p217
        %p422 = pneg %p214
        %p423 = pneg %p238
        %p424 = pneg %p235
        %p425 = pneg %p259
        %p426 = pneg %p256
        %p427 = pneg %p280
        %p428 = pneg %p277
        %p429 = pneg %p306
        %p430 = pneg %p303
        %s431 = sand.u32 %s293, 1
        %s432 = scalar_lea.sflag [#allocation8], %s431
        %s433 = sand.u32 %s293, 1
        %s434 = smul.addr %s433, 32
        %s435 = scalar_lea.vmem [#allocation11], %s434
        %s436 = smul.u32 4, %s28
        %p437 = scmp.lt.s32.totalorder %s436, 7
        %s438 = scalar_select %p437, %s436, 7
        %s439 = smul.addr %s438, 8
        %s440 = scalar_lea.vmem %s0, %s439
        %s441 = smul.u32 4, %s28
        %s442 = smul.u32 4, %s28
        %p444 = scmp.eq.s32.totalorder %s28, 0
        // Predicated region
        $region77: #{tpu_custom_call.1} parent=67 // pred_check
          %p445 = pneg %p444
        $region78: #{tpu_custom_call.1} parent=67 // pred_check_branch
          %447 = sbr.rel (%p445) target = $region80
        $region79: #{tpu_custom_call.1} parent=67 // pred_region
          %v448 = vld [vmem:[%s1] sm:$0xff]
          %v449 = vld [vmem:[#allocation9] sm:$0xff]
          %vm450 = vcmask 64512
          %v452 = vsel %vm450, %v448, 0
          %454 = vmatprep.subr.mxu0 0.0
          %455 = vmatpush1.msra.mxu0 %v449
          %456 = vmatprep.subr.mxu0 0.0
          %457 = vmatpush1.msra.mxu0 0.0
          %458 = vmatprep.subr.mxu0 0.0
          %459 = vmatpush1.msra.mxu0 0.0
          %460 = vmatprep.subr.mxu0 0.0
          %461 = vmatpush1.msra.mxu0 0.0
          %462 = vmatprep.subr.mxu0 0.0
          %463 = vmatpush1.msra.mxu0 0.0
          %464 = vmatprep.subr.mxu0 0.0
          %465 = vmatpush1.msra.mxu0 0.0
          %466 = vmatprep.subr.mxu0 0.0
          %467 = vmatpush1.msra.mxu0 0.0
          %468 = vmatprep.subr.mxu0 0.0
          %469 = vmatpush1.msra.mxu0 0.0
          %470 = vmatprep.subr.mxu0 0.0
          %471 = vmatpush1.msra.mxu0 0.0
          %472 = vmatprep.subr.mxu0 0.0
          %473 = vmatpush1.msra.mxu0 0.0
          %474 = vmatprep.subr.mxu0 0.0
          %475 = vmatpush1.msra.mxu0 0.0
          %476 = vmatprep.subr.mxu0 0.0
          %477 = vmatpush1.msra.mxu0 0.0
          %478 = vmatprep.subr.mxu0 0.0
          %479 = vmatpush1.msra.mxu0 0.0
          %480 = vmatprep.subr.mxu0 0.0
          %481 = vmatpush1.msra.mxu0 0.0
          %482 = vmatprep.subr.mxu0 0.0
          %483 = vmatpush1.msra.mxu0 0.0
          %484 = vmatprep.subr.mxu0 0.0
          %485 = vmatpush1.msra.mxu0 0.0
          %486 = vmatprep.subr.mxu0 0.0
          %487 = vmatpush1.msra.mxu0 0.0
          %488 = vmatprep.subr.mxu0 0.0
          %489 = vmatpush1.msra.mxu0 0.0
          %490 = vmatprep.subr.mxu0 0.0
          %491 = vmatpush1.msra.mxu0 0.0
          %492 = vmatprep.subr.mxu0 0.0
          %493 = vmatpush1.msra.mxu0 0.0
          %494 = vmatprep.subr.mxu0 0.0
          %495 = vmatpush1.msra.mxu0 0.0
          %496 = vmatprep.subr.mxu0 0.0
          %497 = vmatpush1.msra.mxu0 0.0
          %498 = vmatprep.subr.mxu0 0.0
          %499 = vmatpush1.msra.mxu0 0.0
          %500 = vmatprep.subr.mxu0 0.0
          %501 = vmatpush1.msra.mxu0 0.0
          %502 = vmatprep.subr.mxu0 0.0
          %503 = vmatpush1.msra.mxu0 0.0
          %504 = vmatprep.subr.mxu0 0.0
          %505 = vmatpush1.msra.mxu0 0.0
          %506 = vmatprep.subr.mxu0 0.0
          %507 = vmatpush1.msra.mxu0 0.0
          %508 = vmatprep.subr.mxu0 0.0
          %509 = vmatpush1.msra.mxu0 0.0
          %510 = vmatprep.subr.mxu0 0.0
          %511 = vmatpush1.msra.mxu0 0.0
          %512 = vmatprep.subr.mxu0 0.0
          %513 = vmatpush1.msra.mxu0 0.0
          %514 = vmatprep.subr.mxu0 0.0
          %515 = vmatpush1.msra.mxu0 0.0
          %516 = vmatprep.subr.mxu0 0.0
          %517 = vmatpush1.msra.mxu0 0.0
          %518 = vmatprep.mubr.f32.mxu0 0.0
          %519 = vmatmul.mubr.f32.gmra.mrb[0].mxu0 %v452
          %v520 = vpop.f32.mrb[0].mxu0
          %v521 = vadd.f32 0.0, %v520
          %v522 = vpop.f32.mrb[0].mxu0
          %523 = vdwg.mxu0
          %524 = vst [vmem:[#allocation4] sm:$0xff] %v521
          %s525 = scalar_lea.vmem %s1, 8
          %v526 = vld [vmem:[%s525] sm:$0xff]
          %v527 = vld [vmem:[%s8] sm:$0xff]
          %v529 = vsel %vm450, %v526, 0
          %531 = vmatprep.subr.mxu0 0.0
          %532 = vmatpush1.msra.mxu0 %v527
          %533 = vmatprep.subr.mxu0 0.0
          %534 = vmatpush1.msra.mxu0 0.0
          %535 = vmatprep.subr.mxu0 0.0
          %536 = vmatpush1.msra.mxu0 0.0
          %537 = vmatprep.subr.mxu0 0.0
          %538 = vmatpush1.msra.mxu0 0.0
          %539 = vmatprep.subr.mxu0 0.0
          %540 = vmatpush1.msra.mxu0 0.0
          %541 = vmatprep.subr.mxu0 0.0
          %542 = vmatpush1.msra.mxu0 0.0
          %543 = vmatprep.subr.mxu0 0.0
          %544 = vmatpush1.msra.mxu0 0.0
          %545 = vmatprep.subr.mxu0 0.0
          %546 = vmatpush1.msra.mxu0 0.0
          %547 = vmatprep.subr.mxu0 0.0
          %548 = vmatpush1.msra.mxu0 0.0
          %549 = vmatprep.subr.mxu0 0.0
          %550 = vmatpush1.msra.mxu0 0.0
          %551 = vmatprep.subr.mxu0 0.0
          %552 = vmatpush1.msra.mxu0 0.0
          %553 = vmatprep.subr.mxu0 0.0
          %554 = vmatpush1.msra.mxu0 0.0
          %555 = vmatprep.subr.mxu0 0.0
          %556 = vmatpush1.msra.mxu0 0.0
          %557 = vmatprep.subr.mxu0 0.0
          %558 = vmatpush1.msra.mxu0 0.0
          %559 = vmatprep.subr.mxu0 0.0
          %560 = vmatpush1.msra.mxu0 0.0
          %561 = vmatprep.subr.mxu0 0.0
          %562 = vmatpush1.msra.mxu0 0.0
          %563 = vmatprep.subr.mxu0 0.0
          %564 = vmatpush1.msra.mxu0 0.0
          %565 = vmatprep.subr.mxu0 0.0
          %566 = vmatpush1.msra.mxu0 0.0
          %567 = vmatprep.subr.mxu0 0.0
          %568 = vmatpush1.msra.mxu0 0.0
          %569 = vmatprep.subr.mxu0 0.0
          %570 = vmatpush1.msra.mxu0 0.0
          %571 = vmatprep.subr.mxu0 0.0
          %572 = vmatpush1.msra.mxu0 0.0
          %573 = vmatprep.subr.mxu0 0.0
          %574 = vmatpush1.msra.mxu0 0.0
          %575 = vmatprep.subr.mxu0 0.0
          %576 = vmatpush1.msra.mxu0 0.0
          %577 = vmatprep.subr.mxu0 0.0
          %578 = vmatpush1.msra.mxu0 0.0
          %579 = vmatprep.subr.mxu0 0.0
          %580 = vmatpush1.msra.mxu0 0.0
          %581 = vmatprep.subr.mxu0 0.0
          %582 = vmatpush1.msra.mxu0 0.0
          %583 = vmatprep.subr.mxu0 0.0
          %584 = vmatpush1.msra.mxu0 0.0
          %585 = vmatprep.subr.mxu0 0.0
          %586 = vmatpush1.msra.mxu0 0.0
          %587 = vmatprep.subr.mxu0 0.0
          %588 = vmatpush1.msra.mxu0 0.0
          %589 = vmatprep.subr.mxu0 0.0
          %590 = vmatpush1.msra.mxu0 0.0
          %591 = vmatprep.subr.mxu0 0.0
          %592 = vmatpush1.msra.mxu0 0.0
          %593 = vmatprep.subr.mxu0 0.0
          %594 = vmatpush1.msra.mxu0 0.0
          %595 = vmatprep.mubr.f32.mxu0 0.0
          %596 = vmatmul.mubr.f32.gmra.mrb[0].mxu0 %v529
          %v597 = vpop.f32.mrb[0].mxu0
          %v598 = vadd.f32 0.0, %v597
          %v599 = vpop.f32.mrb[0].mxu0
          %600 = vdwg.mxu0
          %s601 = scalar_lea.vmem [#allocation4], 8
          %602 = vst [vmem:[%s601] sm:$0xff] %v598
          %v603 = vld [vmem:[%s2] sm:$0xff]
          %vm604 = vcmask 261120
          %605 = vst.msk [vmem:[#allocation5] sm:$0xff] %vm604, %v603
          %s606 = scalar_lea.vmem %s2, 8
          %v607 = vld [vmem:[%s606] sm:$0xff]
          %s608 = scalar_lea.vmem [#allocation5], 8
          %609 = vst.msk [vmem:[%s608] sm:$0xff] %vm604, %v607
        $region80: #{tpu_custom_call.1} parent=67 // pred_fallthru
          _
        %v610 = vld [vmem:[%s440] sm:$0xff]
        %v611 = vld [vmem:[%s440 + $0x8] sm:$0xff]
        %v612 = vld [vmem:[%s440 + $0x10] sm:$0xff]
        %v613 = vld [vmem:[%s440 + $0x18] sm:$0xff]
        %v614 = vpack.c.bf16 %v611, %v610
        %v615 = vpack.c.bf16 %v613, %v612
        %v616 = vld [vmem:[#allocation6] sm:$0xf]
        %v617 = vld [vmem:[#allocation6 + $0x4] sm:$0xf]
        %v618 = vld [vmem:[%s5] sm:$0x1]
        %v620 = vlaneseq
        %v621 = vshrl.u32 %v620, 7
        %v622 = vsub.s32 0, %v621
        %v623 = vrot.slane %v618, %v622
        %v627 = vunpack.c.l.b16 %v616
        %v628 = vunpack.c.l.b16 %v617
        %v629 = vpack.c.b16 %v628, %v627
        %vm631 = vcmask 130048
        %v633 = vsel %vm631, %v614, 0
        %v636 = vsel %vm631, %v615, 0
        %638 = vmatprep.subr.bf16.mxu0 0
        %639 = vmatpush1.bf16.msra.mxu0 %v629
        %640 = vmatprep.subr.bf16.mxu0 0
        %641 = vmatpush1.bf16.msra.mxu0 0
        %642 = vmatprep.subr.bf16.mxu0 0
        %643 = vmatpush1.bf16.msra.mxu0 0
        %644 = vmatprep.subr.bf16.mxu0 0
        %645 = vmatpush1.bf16.msra.mxu0 0
        %646 = vmatprep.subr.bf16.mxu0 0
        %647 = vmatpush1.bf16.msra.mxu0 0
        %648 = vmatprep.subr.bf16.mxu0 0
        %649 = vmatpush1.bf16.msra.mxu0 0
        %650 = vmatprep.subr.bf16.mxu0 0
        %651 = vmatpush1.bf16.msra.mxu0 0
        %652 = vmatprep.subr.bf16.mxu0 0
        %653 = vmatpush1.bf16.msra.mxu0 0
        %654 = vmatprep.subr.bf16.mxu0 0
        %655 = vmatpush1.bf16.msra.mxu0 0
        %656 = vmatprep.subr.bf16.mxu0 0
        %657 = vmatpush1.bf16.msra.mxu0 0
        %658 = vmatprep.subr.bf16.mxu0 0
        %659 = vmatpush1.bf16.msra.mxu0 0
        %660 = vmatprep.subr.bf16.mxu0 0
        %661 = vmatpush1.bf16.msra.mxu0 0
        %662 = vmatprep.subr.bf16.mxu0 0
        %663 = vmatpush1.bf16.msra.mxu0 0
        %664 = vmatprep.subr.bf16.mxu0 0
        %665 = vmatpush1.bf16.msra.mxu0 0
        %666 = vmatprep.subr.bf16.mxu0 0
        %667 = vmatpush1.bf16.msra.mxu0 0
        %668 = vmatprep.subr.bf16.mxu0 0
        %669 = vmatpush1.bf16.msra.mxu0 0
        %670 = vmatprep.mubr.bf16.mxu0 0
        %671 = vmatmul.mubr.bf16.gmra.mrb[0].mxu0 %v633
        %v672 = vpop.f32.mrb[0].mxu0
        %v673 = vadd.f32 %v623, %v672
        %v674 = vpop.f32.mrb[0].mxu0
        %v675 = vpop.f32.mrb[0].mxu0
        %v676 = vadd.f32 %v623, %v675
        %v677 = vpop.f32.mrb[0].mxu0
        %678 = vmatprep.mubr.bf16.mxu0 0
        %679 = vmatmul.mubr.bf16.gmra.mrb[0].mxu0 %v636
        %v680 = vpop.f32.mrb[0].mxu0
        %v681 = vadd.f32 %v623, %v680
        %v682 = vpop.f32.mrb[0].mxu0
        %v683 = vpop.f32.mrb[0].mxu0
        %v684 = vadd.f32 %v623, %v683
        %v685 = vpop.f32.mrb[0].mxu0
        %686 = vdwg.mxu0
        %687 = vst [vmem:[#allocation2] sm:$0xff] %v673
        %688 = vst [vmem:[#allocation2 + $0x8] sm:$0xff] %v676
        %689 = vst [vmem:[#allocation2 + $0x10] sm:$0xff] %v681
        %690 = vst [vmem:[#allocation2 + $0x18] sm:$0xff] %v684
        %v691 = vld [vmem:[%s6] sm:$0xf]
        %v692 = vld [vmem:[%s6 + $0x4] sm:$0xf]
        %v693 = vld [vmem:[%s6 + $0x8] sm:$0xf]
        %v694 = vld [vmem:[%s6 + $0xc] sm:$0xf]
        %v695 = vld [vmem:[#allocation4] sm:$0xff]
        %v696 = vld [vmem:[#allocation5] sm:$0xff]
        %v697 = vld [vmem:[#allocation2] sm:$0xff]
        %v698 = vadd.f32 %v697, %v695
        %v699 = vxor.u32 %v698, 2147483648
        %v700 = vmul.f32 %v699, 1.442695
        %v701 = vpow.pop %v700
        %v702 = vadd.f32 %v701, 1.0
        %v703 = vrcp.pop %v702
        %v704 = vmul.f32 1.0, %v703
        %v705 = vtanh.pop %v698
        %707 = vrot.lane.b32.xlu0 %v696, 32
        %v708 = vpop.permute.xlu0 %707
        %v710 = vmul.f32 %v704, %v708
        %712 = vrot.lane.b32.xlu0 %v705, 64
        %v713 = vpop.permute.xlu0 %712
        %v715 = vmul.f32 %v704, %v713
        %717 = vrot.lane.b32.xlu0 %v715, 32
        %v718 = vpop.permute.xlu0 %717
        %v720 = vadd.f32 %v710, %v718
        %v721 = vtanh.pop %v720
        %723 = vrot.lane.b32.xlu0 %v721, 64
        %v724 = vpop.permute.xlu0 %723
        %v726 = vmul.f32 %v704, %v724
        %728 = vrot.lane.b32.xlu0 %v726, 32
        %v729 = vpop.permute.xlu0 %728
        %vm731 = vcmask 261120
        %732 = vst.msk [vmem:[#allocation3] sm:$0xff] %vm731, %v729
        %v733 = vpack.c.bf16 %v726, %v726
        %735 = vrot.lane.b32.xlu0 %v733, 32
        %v736 = vpop.permute.xlu0 %735
        %v741 = vunpack.c.l.b16 %v691
        %v742 = vunpack.c.l.b16 %v692
        %v743 = vunpack.c.l.b16 %v693
        %v744 = vunpack.c.l.b16 %v694
        %v745 = vpack.c.b16 %v742, %v741
        %v746 = vpack.c.b16 %v744, %v743
        %v750 = vsel %vm731, %v736, 0
        %752 = vmatprep.subr.bf16.mxu0 0
        %753 = vmatpush1.bf16.msra.mxu0 %v745
        %754 = vmatprep.subr.bf16.mxu0 0
        %755 = vmatpush1.bf16.msra.mxu0 %v746
        %756 = vmatprep.subr.bf16.mxu0 0
        %757 = vmatpush1.bf16.msra.mxu0 0
        %758 = vmatprep.subr.bf16.mxu0 0
        %759 = vmatpush1.bf16.msra.mxu0 0
        %760 = vmatprep.subr.bf16.mxu0 0
        %761 = vmatpush1.bf16.msra.mxu0 0
        %762 = vmatprep.subr.bf16.mxu0 0
        %763 = vmatpush1.bf16.msra.mxu0 0
        %764 = vmatprep.subr.bf16.mxu0 0
        %765 = vmatpush1.bf16.msra.mxu0 0
        %766 = vmatprep.subr.bf16.mxu0 0
        %767 = vmatpush1.bf16.msra.mxu0 0
        %768 = vmatprep.subr.bf16.mxu0 0
        %769 = vmatpush1.bf16.msra.mxu0 0
        %770 = vmatprep.subr.bf16.mxu0 0
        %771 = vmatpush1.bf16.msra.mxu0 0
        %772 = vmatprep.subr.bf16.mxu0 0
        %773 = vmatpush1.bf16.msra.mxu0 0
        %774 = vmatprep.subr.bf16.mxu0 0
        %775 = vmatpush1.bf16.msra.mxu0 0
        %776 = vmatprep.subr.bf16.mxu0 0
        %777 = vmatpush1.bf16.msra.mxu0 0
        %778 = vmatprep.subr.bf16.mxu0 0
        %779 = vmatpush1.bf16.msra.mxu0 0
        %780 = vmatprep.subr.bf16.mxu0 0
        %781 = vmatpush1.bf16.msra.mxu0 0
        %782 = vmatprep.subr.bf16.mxu0 0
        %783 = vmatpush1.bf16.msra.mxu0 0
        %784 = vmatprep.mubr.bf16.mxu0 0
        %785 = vmatmul.mubr.bf16.gmra.mrb[0].mxu0 %v750
        %v786 = vpop.f32.mrb[0].mxu0
        %v787 = vadd.f32 0.0, %v786
        %v788 = vpop.f32.mrb[0].mxu0
        %v789 = vpop.f32.mrb[0].mxu0
        %v790 = vpop.f32.mrb[0].mxu0
        %791 = vdwg.mxu0
        %s792 = scalar_lea.vmem [#allocation2], 8
        %v793 = vld [vmem:[%s792] sm:$0xff]
        %v794 = vadd.f32 %v793, %v787
        %v795 = vxor.u32 %v794, 2147483648
        %v796 = vmul.f32 %v795, 1.442695
        %v797 = vpow.pop %v796
        %v798 = vadd.f32 %v797, 1.0
        %v799 = vrcp.pop %v798
        %v800 = vmul.f32 1.0, %v799
        %v801 = vtanh.pop %v794
        %v802 = vmul.f32 %v800, %v720
        %804 = vrot.lane.b32.xlu0 %v801, 64
        %v805 = vpop.permute.xlu0 %804
        %v807 = vmul.f32 %v800, %v805
        %809 = vrot.lane.b32.xlu0 %v807, 32
        %v810 = vpop.permute.xlu0 %809
        %v812 = vadd.f32 %v802, %v810
        %v813 = vtanh.pop %v812
        %815 = vrot.lane.b32.xlu0 %v813, 64
        %v816 = vpop.permute.xlu0 %815
        %v818 = vmul.f32 %v800, %v816
        %820 = vrot.lane.b32.xlu0 %v818, 32
        %v821 = vpop.permute.xlu0 %820
        %s823 = scalar_lea.vmem [#allocation3], 8
        %824 = vst.msk [vmem:[%s823] sm:$0xff] %vm731, %v821
        %v825 = vpack.c.bf16 %v818, %v818
        %827 = vrot.lane.b32.xlu0 %v825, 32
        %v828 = vpop.permute.xlu0 %827
        %v830 = vsel %vm731, %v828, 0
        %832 = vmatprep.subr.bf16.mxu0 0
        %833 = vmatpush1.bf16.msra.mxu0 %v745
        %834 = vmatprep.subr.bf16.mxu0 0
        %835 = vmatpush1.bf16.msra.mxu0 %v746
        %836 = vmatprep.subr.bf16.mxu0 0
        %837 = vmatpush1.bf16.msra.mxu0 0
        %838 = vmatprep.subr.bf16.mxu0 0
        %839 = vmatpush1.bf16.msra.mxu0 0
        %840 = vmatprep.subr.bf16.mxu0 0
        %841 = vmatpush1.bf16.msra.mxu0 0
        %842 = vmatprep.subr.bf16.mxu0 0
        %843 = vmatpush1.bf16.msra.mxu0 0
        %844 = vmatprep.subr.bf16.mxu0 0
        %845 = vmatpush1.bf16.msra.mxu0 0
        %846 = vmatprep.subr.bf16.mxu0 0
        %847 = vmatpush1.bf16.msra.mxu0 0
        %848 = vmatprep.subr.bf16.mxu0 0
        %849 = vmatpush1.bf16.msra.mxu0 0
        %850 = vmatprep.subr.bf16.mxu0 0
        %851 = vmatpush1.bf16.msra.mxu0 0
        %852 = vmatprep.subr.bf16.mxu0 0
        %853 = vmatpush1.bf16.msra.mxu0 0
        %854 = vmatprep.subr.bf16.mxu0 0
        %855 = vmatpush1.bf16.msra.mxu0 0
        %856 = vmatprep.subr.bf16.mxu0 0
        %857 = vmatpush1.bf16.msra.mxu0 0
        %858 = vmatprep.subr.bf16.mxu0 0
        %859 = vmatpush1.bf16.msra.mxu0 0
        %860 = vmatprep.subr.bf16.mxu0 0
        %861 = vmatpush1.bf16.msra.mxu0 0
        %862 = vmatprep.subr.bf16.mxu0 0
        %863 = vmatpush1.bf16.msra.mxu0 0
        %864 = vmatprep.mubr.bf16.mxu0 0
        %865 = vmatmul.mubr.bf16.gmra.mrb[0].mxu0 %v830
        %v866 = vpop.f32.mrb[0].mxu0
        %v867 = vadd.f32 0.0, %v866
        %v868 = vpop.f32.mrb[0].mxu0
        %v869 = vpop.f32.mrb[0].mxu0
        %v870 = vpop.f32.mrb[0].mxu0
        %871 = vdwg.mxu0
        %s872 = scalar_lea.vmem [#allocation2], 16
        %v873 = vld [vmem:[%s872] sm:$0xff]
        %v874 = vadd.f32 %v873, %v867
        %v875 = vxor.u32 %v874, 2147483648
        %v876 = vmul.f32 %v875, 1.442695
        %v877 = vpow.pop %v876
        %v878 = vadd.f32 %v877, 1.0
        %v879 = vrcp.pop %v878
        %v880 = vmul.f32 1.0, %v879
        %v881 = vtanh.pop %v874
        %v882 = vmul.f32 %v880, %v812
        %884 = vrot.lane.b32.xlu0 %v881, 64
        %v885 = vpop.permute.xlu0 %884
        %v887 = vmul.f32 %v880, %v885
        %889 = vrot.lane.b32.xlu0 %v887, 32
        %v890 = vpop.permute.xlu0 %889
        %v892 = vadd.f32 %v882, %v890
        %v893 = vtanh.pop %v892
        %895 = vrot.lane.b32.xlu0 %v893, 64
        %v896 = vpop.permute.xlu0 %895
        %v898 = vmul.f32 %v880, %v896
        %900 = vrot.lane.b32.xlu0 %v898, 32
        %v901 = vpop.permute.xlu0 %900
        %s903 = scalar_lea.vmem [#allocation3], 16
        %904 = vst.msk [vmem:[%s903] sm:$0xff] %vm731, %v901
        %v905 = vpack.c.bf16 %v898, %v898
        %907 = vrot.lane.b32.xlu0 %v905, 32
        %v908 = vpop.permute.xlu0 %907
        %v910 = vsel %vm731, %v908, 0
        %912 = vmatprep.subr.bf16.mxu0 0
        %913 = vmatpush1.bf16.msra.mxu0 %v745
        %914 = vmatprep.subr.bf16.mxu0 0
        %915 = vmatpush1.bf16.msra.mxu0 %v746
        %916 = vmatprep.subr.bf16.mxu0 0
        %917 = vmatpush1.bf16.msra.mxu0 0
        %918 = vmatprep.subr.bf16.mxu0 0
        %919 = vmatpush1.bf16.msra.mxu0 0
        %920 = vmatprep.subr.bf16.mxu0 0
        %921 = vmatpush1.bf16.msra.mxu0 0
        %922 = vmatprep.subr.bf16.mxu0 0
        %923 = vmatpush1.bf16.msra.mxu0 0
        %924 = vmatprep.subr.bf16.mxu0 0
        %925 = vmatpush1.bf16.msra.mxu0 0
        %926 = vmatprep.subr.bf16.mxu0 0
        %927 = vmatpush1.bf16.msra.mxu0 0
        %928 = vmatprep.subr.bf16.mxu0 0
        %929 = vmatpush1.bf16.msra.mxu0 0
        %930 = vmatprep.subr.bf16.mxu0 0
        %931 = vmatpush1.bf16.msra.mxu0 0
        %932 = vmatprep.subr.bf16.mxu0 0
        %933 = vmatpush1.bf16.msra.mxu0 0
        %934 = vmatprep.subr.bf16.mxu0 0
        %935 = vmatpush1.bf16.msra.mxu0 0
        %936 = vmatprep.subr.bf16.mxu0 0
        %937 = vmatpush1.bf16.msra.mxu0 0
        %938 = vmatprep.subr.bf16.mxu0 0
        %939 = vmatpush1.bf16.msra.mxu0 0
        %940 = vmatprep.subr.bf16.mxu0 0
        %941 = vmatpush1.bf16.msra.mxu0 0
        %942 = vmatprep.subr.bf16.mxu0 0
        %943 = vmatpush1.bf16.msra.mxu0 0
        %944 = vmatprep.mubr.bf16.mxu0 0
        %945 = vmatmul.mubr.bf16.gmra.mrb[0].mxu0 %v910
        %v946 = vpop.f32.mrb[0].mxu0
        %v947 = vadd.f32 0.0, %v946
        %v948 = vpop.f32.mrb[0].mxu0
        %v949 = vpop.f32.mrb[0].mxu0
        %v950 = vpop.f32.mrb[0].mxu0
        %951 = vdwg.mxu0
        %s952 = scalar_lea.vmem [#allocation2], 24
        %v953 = vld [vmem:[%s952] sm:$0xff]
        %v954 = vadd.f32 %v953, %v947
        %v955 = vxor.u32 %v954, 2147483648
        %v956 = vmul.f32 %v955, 1.442695
        %v957 = vpow.pop %v956
        %v958 = vadd.f32 %v957, 1.0
        %v959 = vrcp.pop %v958
        %v960 = vmul.f32 1.0, %v959
        %v961 = vtanh.pop %v954
        %v962 = vmul.f32 %v960, %v892
        %964 = vrot.lane.b32.xlu0 %v961, 64
        %v965 = vpop.permute.xlu0 %964
        %v967 = vmul.f32 %v960, %v965
        %969 = vrot.lane.b32.xlu0 %v967, 32
        %v970 = vpop.permute.xlu0 %969
        %v972 = vadd.f32 %v962, %v970
        %v973 = vtanh.pop %v972
        %975 = vrot.lane.b32.xlu0 %v973, 64
        %v976 = vpop.permute.xlu0 %975
        %v978 = vmul.f32 %v960, %v976
        %980 = vrot.lane.b32.xlu0 %v978, 32
        %v981 = vpop.permute.xlu0 %980
        %s983 = scalar_lea.vmem [#allocation3], 24
        %984 = vst.msk [vmem:[%s983] sm:$0xff] %vm731, %v981
        %v985 = vpack.c.bf16 %v978, %v978
        %987 = vrot.lane.b32.xlu0 %v985, 32
        %v988 = vpop.permute.xlu0 %987
        %v990 = vsel %vm731, %v988, 0
        %992 = vmatprep.subr.bf16.mxu0 0
        %993 = vmatpush1.bf16.msra.mxu0 %v745
        %994 = vmatprep.subr.bf16.mxu0 0
        %995 = vmatpush1.bf16.msra.mxu0 %v746
        %996 = vmatprep.subr.bf16.mxu0 0
        %997 = vmatpush1.bf16.msra.mxu0 0
        %998 = vmatprep.subr.bf16.mxu0 0
        %999 = vmatpush1.bf16.msra.mxu0 0
        %1000 = vmatprep.subr.bf16.mxu0 0
        %1001 = vmatpush1.bf16.msra.mxu0 0
        %1002 = vmatprep.subr.bf16.mxu0 0
        %1003 = vmatpush1.bf16.msra.mxu0 0
        %1004 = vmatprep.subr.bf16.mxu0 0
        %1005 = vmatpush1.bf16.msra.mxu0 0
        %1006 = vmatprep.subr.bf16.mxu0 0
        %1007 = vmatpush1.bf16.msra.mxu0 0
        %1008 = vmatprep.subr.bf16.mxu0 0
        %1009 = vmatpush1.bf16.msra.mxu0 0
        %1010 = vmatprep.subr.bf16.mxu0 0
        %1011 = vmatpush1.bf16.msra.mxu0 0
        %1012 = vmatprep.subr.bf16.mxu0 0
        %1013 = vmatpush1.bf16.msra.mxu0 0
        %1014 = vmatprep.subr.bf16.mxu0 0
        %1015 = vmatpush1.bf16.msra.mxu0 0
        %1016 = vmatprep.subr.bf16.mxu0 0
        %1017 = vmatpush1.bf16.msra.mxu0 0
        %1018 = vmatprep.subr.bf16.mxu0 0
        %1019 = vmatpush1.bf16.msra.mxu0 0
        %1020 = vmatprep.subr.bf16.mxu0 0
        %1021 = vmatpush1.bf16.msra.mxu0 0
        %1022 = vmatprep.subr.bf16.mxu0 0
        %1023 = vmatpush1.bf16.msra.mxu0 0
        %1024 = vmatprep.mubr.bf16.mxu0 0
        %1025 = vmatmul.mubr.bf16.gmra.mrb[0].mxu0 %v990
        %v1026 = vpop.f32.mrb[0].mxu0
        %v1027 = vadd.f32 0.0, %v1026
        %v1028 = vpop.f32.mrb[0].mxu0
        %v1029 = vpop.f32.mrb[0].mxu0
        %v1030 = vpop.f32.mrb[0].mxu0
        %1031 = vdwg.mxu0
        %1032 = vst [vmem:[#allocation4] sm:$0xff] %v1027
        %1034 = vrot.lane.b32.xlu0 %v972, 96
        %v1035 = vpop.permute.xlu0 %1034
        %1037 = vst.msk [vmem:[#allocation5] sm:$0xff] %vm731, %v1035
        %v1038 = vld [vmem:[#allocation3] sm:$0xff]
        %v1039 = vld [vmem:[#allocation3 + $0x8] sm:$0xff]
        %v1040 = vld [vmem:[#allocation3 + $0x10] sm:$0xff]
        %v1041 = vld [vmem:[#allocation3 + $0x18] sm:$0xff]
        %v1042 = vpack.c.bf16 %v1039, %v1038
        %v1043 = vpack.c.bf16 %v1041, %v1040
        %v1044 = vld [vmem:[%s7] sm:$0xf]
        %v1045 = vld [vmem:[%s7 + $0x4] sm:$0xf]
        %v1046 = vld [vmem:[%s7 + $0x8] sm:$0xf]
        %v1047 = vld [vmem:[%s7 + $0xc] sm:$0xf]
        %v1048 = vld [vmem:[%s9] sm:$0x1]
        %v1050 = vlaneseq
        %v1051 = vshrl.u32 %v1050, 7
        %v1052 = vsub.s32 0, %v1051
        %v1053 = vrot.slane %v1048, %v1052
        %v1059 = vunpack.c.l.b16 %v1044
        %v1060 = vunpack.c.l.b16 %v1045
        %v1061 = vunpack.c.l.b16 %v1046
        %v1062 = vunpack.c.l.b16 %v1047
        %v1063 = vpack.c.b16 %v1060, %v1059
        %v1064 = vpack.c.b16 %v1062, %v1061
        %v1068 = vsel %vm731, %v1042, 0
        %v1071 = vsel %vm731, %v1043, 0
        %1073 = vmatprep.subr.bf16.mxu0 0
        %1074 = vmatpush1.bf16.msra.mxu0 %v1063
        %1075 = vmatprep.subr.bf16.mxu0 0
        %1076 = vmatpush1.bf16.msra.mxu0 %v1064
        %1077 = vmatprep.subr.bf16.mxu0 0
        %1078 = vmatpush1.bf16.msra.mxu0 0
        %1079 = vmatprep.subr.bf16.mxu0 0
        %1080 = vmatpush1.bf16.msra.mxu0 0
        %1081 = vmatprep.subr.bf16.mxu0 0
        %1082 = vmatpush1.bf16.msra.mxu0 0
        %1083 = vmatprep.subr.bf16.mxu0 0
        %1084 = vmatpush1.bf16.msra.mxu0 0
        %1085 = vmatprep.subr.bf16.mxu0 0
        %1086 = vmatpush1.bf16.msra.mxu0 0
        %1087 = vmatprep.subr.bf16.mxu0 0
        %1088 = vmatpush1.bf16.msra.mxu0 0
        %1089 = vmatprep.subr.bf16.mxu0 0
        %1090 = vmatpush1.bf16.msra.mxu0 0
        %1091 = vmatprep.subr.bf16.mxu0 0
        %1092 = vmatpush1.bf16.msra.mxu0 0
        %1093 = vmatprep.subr.bf16.mxu0 0
        %1094 = vmatpush1.bf16.msra.mxu0 0
        %1095 = vmatprep.subr.bf16.mxu0 0
        %1096 = vmatpush1.bf16.msra.mxu0 0
        %1097 = vmatprep.subr.bf16.mxu0 0
        %1098 = vmatpush1.bf16.msra.mxu0 0
        %1099 = vmatprep.subr.bf16.mxu0 0
        %1100 = vmatpush1.bf16.msra.mxu0 0
        %1101 = vmatprep.subr.bf16.mxu0 0
        %1102 = vmatpush1.bf16.msra.mxu0 0
        %1103 = vmatprep.subr.bf16.mxu0 0
        %1104 = vmatpush1.bf16.msra.mxu0 0
        %1105 = vmatprep.mubr.bf16.mxu0 0
        %1106 = vmatmul.mubr.bf16.gmra.mrb[0].mxu0 %v1068
        %v1107 = vpop.f32.mrb[0].mxu0
        %v1108 = vadd.f32 %v1053, %v1107
        %v1109 = vpop.f32.mrb[0].mxu0
        %v1110 = vpop.f32.mrb[0].mxu0
        %v1111 = vadd.f32 %v1053, %v1110
        %v1112 = vpop.f32.mrb[0].mxu0
        %1113 = vmatprep.mubr.bf16.mxu0 0
        %1114 = vmatmul.mubr.bf16.gmra.mrb[0].mxu0 %v1071
        %v1115 = vpop.f32.mrb[0].mxu0
        %v1116 = vadd.f32 %v1053, %v1115
        %v1117 = vpop.f32.mrb[0].mxu0
        %v1118 = vpop.f32.mrb[0].mxu0
        %v1119 = vadd.f32 %v1053, %v1118
        %v1120 = vpop.f32.mrb[0].mxu0
        %1121 = vdwg.mxu0
        %1122 = vst [vmem:[#allocation2] sm:$0xff] %v1108
        %1123 = vst [vmem:[#allocation2 + $0x8] sm:$0xff] %v1111
        %1124 = vst [vmem:[#allocation2 + $0x10] sm:$0xff] %v1116
        %1125 = vst [vmem:[#allocation2 + $0x18] sm:$0xff] %v1119
        %v1126 = vld [vmem:[%s10] sm:$0xf]
        %v1127 = vld [vmem:[%s10 + $0x4] sm:$0xf]
        %v1128 = vld [vmem:[%s10 + $0x8] sm:$0xf]
        %v1129 = vld [vmem:[%s10 + $0xc] sm:$0xf]
        %s1130 = scalar_lea.vmem [#allocation4], 8
        %v1131 = vld [vmem:[%s1130] sm:$0xff]
        %s1132 = scalar_lea.vmem [#allocation5], 8
        %v1133 = vld [vmem:[%s1132] sm:$0xff]
        %v1134 = vld [vmem:[#allocation2] sm:$0xff]
        %v1135 = vadd.f32 %v1134, %v1131
        %v1136 = vxor.u32 %v1135, 2147483648
        %v1137 = vmul.f32 %v1136, 1.442695
        %v1138 = vpow.pop %v1137
        %v1139 = vadd.f32 %v1138, 1.0
        %v1140 = vrcp.pop %v1139
        %v1141 = vmul.f32 1.0, %v1140
        %v1142 = vtanh.pop %v1135
        %1144 = vrot.lane.b32.xlu0 %v1133, 32
        %v1145 = vpop.permute.xlu0 %1144
        %v1147 = vmul.f32 %v1141, %v1145
        %1149 = vrot.lane.b32.xlu0 %v1142, 64
        %v1150 = vpop.permute.xlu0 %1149
        %v1152 = vmul.f32 %v1141, %v1150
        %1154 = vrot.lane.b32.xlu0 %v1152, 32
        %v1155 = vpop.permute.xlu0 %1154
        %v1157 = vadd.f32 %v1147, %v1155
        %v1158 = vtanh.pop %v1157
        %1160 = vrot.lane.b32.xlu0 %v1158, 64
        %v1161 = vpop.permute.xlu0 %1160
        %v1163 = vmul.f32 %v1141, %v1161
        %1165 = vrot.lane.b32.xlu0 %v1163, 32
        %v1166 = vpop.permute.xlu0 %1165
        %1168 = vst.msk [vmem:[#allocation3] sm:$0xff] %vm731, %v1166
        %v1169 = vpack.c.bf16 %v1163, %v1163
        %1171 = vrot.lane.b32.xlu0 %v1169, 32
        %v1172 = vpop.permute.xlu0 %1171
        %v1177 = vunpack.c.l.b16 %v1126
        %v1178 = vunpack.c.l.b16 %v1127
        %v1179 = vunpack.c.l.b16 %v1128
        %v1180 = vunpack.c.l.b16 %v1129
        %v1181 = vpack.c.b16 %v1178, %v1177
        %v1182 = vpack.c.b16 %v1180, %v1179
        %v1186 = vsel %vm731, %v1172, 0
        %1188 = vmatprep.subr.bf16.mxu0 0
        %1189 = vmatpush1.bf16.msra.mxu0 %v1181
        %1190 = vmatprep.subr.bf16.mxu0 0
        %1191 = vmatpush1.bf16.msra.mxu0 %v1182
        %1192 = vmatprep.subr.bf16.mxu0 0
        %1193 = vmatpush1.bf16.msra.mxu0 0
        %1194 = vmatprep.subr.bf16.mxu0 0
        %1195 = vmatpush1.bf16.msra.mxu0 0
        %1196 = vmatprep.subr.bf16.mxu0 0
        %1197 = vmatpush1.bf16.msra.mxu0 0
        %1198 = vmatprep.subr.bf16.mxu0 0
        %1199 = vmatpush1.bf16.msra.mxu0 0
        %1200 = vmatprep.subr.bf16.mxu0 0
        %1201 = vmatpush1.bf16.msra.mxu0 0
        %1202 = vmatprep.subr.bf16.mxu0 0
        %1203 = vmatpush1.bf16.msra.mxu0 0
        %1204 = vmatprep.subr.bf16.mxu0 0
        %1205 = vmatpush1.bf16.msra.mxu0 0
        %1206 = vmatprep.subr.bf16.mxu0 0
        %1207 = vmatpush1.bf16.msra.mxu0 0
        %1208 = vmatprep.subr.bf16.mxu0 0
        %1209 = vmatpush1.bf16.msra.mxu0 0
        %1210 = vmatprep.subr.bf16.mxu0 0
        %1211 = vmatpush1.bf16.msra.mxu0 0
        %1212 = vmatprep.subr.bf16.mxu0 0
        %1213 = vmatpush1.bf16.msra.mxu0 0
        %1214 = vmatprep.subr.bf16.mxu0 0
        %1215 = vmatpush1.bf16.msra.mxu0 0
        %1216 = vmatprep.subr.bf16.mxu0 0
        %1217 = vmatpush1.bf16.msra.mxu0 0
        %1218 = vmatprep.subr.bf16.mxu0 0
        %1219 = vmatpush1.bf16.msra.mxu0 0
        %1220 = vmatprep.mubr.bf16.mxu0 0
        %1221 = vmatmul.mubr.bf16.gmra.mrb[0].mxu0 %v1186
        %v1222 = vpop.f32.mrb[0].mxu0
        %v1223 = vadd.f32 0.0, %v1222
        %v1224 = vpop.f32.mrb[0].mxu0
        %v1225 = vpop.f32.mrb[0].mxu0
        %v1226 = vpop.f32.mrb[0].mxu0
        %1227 = vdwg.mxu0
        %v1228 = vld [vmem:[%s792] sm:$0xff]
        %v1229 = vadd.f32 %v1228, %v1223
        %v1230 = vxor.u32 %v1229, 2147483648
        %v1231 = vmul.f32 %v1230, 1.442695
        %v1232 = vpow.pop %v1231
        %v1233 = vadd.f32 %v1232, 1.0
        %v1234 = vrcp.pop %v1233
        %v1235 = vmul.f32 1.0, %v1234
        %v1236 = vtanh.pop %v1229
        %v1237 = vmul.f32 %v1235, %v1157
        %1239 = vrot.lane.b32.xlu0 %v1236, 64
        %v1240 = vpop.permute.xlu0 %1239
        %v1242 = vmul.f32 %v1235, %v1240
        %1244 = vrot.lane.b32.xlu0 %v1242, 32
        %v1245 = vpop.permute.xlu0 %1244
        %v1247 = vadd.f32 %v1237, %v1245
        %v1248 = vtanh.pop %v1247
        %1250 = vrot.lane.b32.xlu0 %v1248, 64
        %v1251 = vpop.permute.xlu0 %1250
        %v1253 = vmul.f32 %v1235, %v1251
        %1255 = vrot.lane.b32.xlu0 %v1253, 32
        %v1256 = vpop.permute.xlu0 %1255
        %1258 = vst.msk [vmem:[%s823] sm:$0xff] %vm731, %v1256
        %v1259 = vpack.c.bf16 %v1253, %v1253
        %1261 = vrot.lane.b32.xlu0 %v1259, 32
        %v1262 = vpop.permute.xlu0 %1261
        %v1264 = vsel %vm731, %v1262, 0
        %1266 = vmatprep.subr.bf16.mxu0 0
        %1267 = vmatpush1.bf16.msra.mxu0 %v1181
        %1268 = vmatprep.subr.bf16.mxu0 0
        %1269 = vmatpush1.bf16.msra.mxu0 %v1182
        %1270 = vmatprep.subr.bf16.mxu0 0
        %1271 = vmatpush1.bf16.msra.mxu0 0
        %1272 = vmatprep.subr.bf16.mxu0 0
        %1273 = vmatpush1.bf16.msra.mxu0 0
        %1274 = vmatprep.subr.bf16.mxu0 0
        %1275 = vmatpush1.bf16.msra.mxu0 0
        %1276 = vmatprep.subr.bf16.mxu0 0
        %1277 = vmatpush1.bf16.msra.mxu0 0
        %1278 = vmatprep.subr.bf16.mxu0 0
        %1279 = vmatpush1.bf16.msra.mxu0 0
        %1280 = vmatprep.subr.bf16.mxu0 0
        %1281 = vmatpush1.bf16.msra.mxu0 0
        %1282 = vmatprep.subr.bf16.mxu0 0
        %1283 = vmatpush1.bf16.msra.mxu0 0
        %1284 = vmatprep.subr.bf16.mxu0 0
        %1285 = vmatpush1.bf16.msra.mxu0 0
        %1286 = vmatprep.subr.bf16.mxu0 0
        %1287 = vmatpush1.bf16.msra.mxu0 0
        %1288 = vmatprep.subr.bf16.mxu0 0
        %1289 = vmatpush1.bf16.msra.mxu0 0
        %1290 = vmatprep.subr.bf16.mxu0 0
        %1291 = vmatpush1.bf16.msra.mxu0 0
        %1292 = vmatprep.subr.bf16.mxu0 0
        %1293 = vmatpush1.bf16.msra.mxu0 0
        %1294 = vmatprep.subr.bf16.mxu0 0
        %1295 = vmatpush1.bf16.msra.mxu0 0
        %1296 = vmatprep.subr.bf16.mxu0 0
        %1297 = vmatpush1.bf16.msra.mxu0 0
        %1298 = vmatprep.mubr.bf16.mxu0 0
        %1299 = vmatmul.mubr.bf16.gmra.mrb[0].mxu0 %v1264
        %v1300 = vpop.f32.mrb[0].mxu0
        %v1301 = vadd.f32 0.0, %v1300
        %v1302 = vpop.f32.mrb[0].mxu0
        %v1303 = vpop.f32.mrb[0].mxu0
        %v1304 = vpop.f32.mrb[0].mxu0
        %1305 = vdwg.mxu0
        %v1306 = vld [vmem:[%s872] sm:$0xff]
        %v1307 = vadd.f32 %v1306, %v1301
        %v1308 = vxor.u32 %v1307, 2147483648
        %v1309 = vmul.f32 %v1308, 1.442695
        %v1310 = vpow.pop %v1309
        %v1311 = vadd.f32 %v1310, 1.0
        %v1312 = vrcp.pop %v1311
        %v1313 = vmul.f32 1.0, %v1312
        %v1314 = vtanh.pop %v1307
        %v1315 = vmul.f32 %v1313, %v1247
        %1317 = vrot.lane.b32.xlu0 %v1314, 64
        %v1318 = vpop.permute.xlu0 %1317
        %v1320 = vmul.f32 %v1313, %v1318
        %1322 = vrot.lane.b32.xlu0 %v1320, 32
        %v1323 = vpop.permute.xlu0 %1322
        %v1325 = vadd.f32 %v1315, %v1323
        %v1326 = vtanh.pop %v1325
        %1328 = vrot.lane.b32.xlu0 %v1326, 64
        %v1329 = vpop.permute.xlu0 %1328
        %v1331 = vmul.f32 %v1313, %v1329
        %1333 = vrot.lane.b32.xlu0 %v1331, 32
        %v1334 = vpop.permute.xlu0 %1333
        %1336 = vst.msk [vmem:[%s903] sm:$0xff] %vm731, %v1334
        %v1337 = vpack.c.bf16 %v1331, %v1331
        %1339 = vrot.lane.b32.xlu0 %v1337, 32
        %v1340 = vpop.permute.xlu0 %1339
        %v1342 = vsel %vm731, %v1340, 0
        %1344 = vmatprep.subr.bf16.mxu0 0
        %1345 = vmatpush1.bf16.msra.mxu0 %v1181
        %1346 = vmatprep.subr.bf16.mxu0 0
        %1347 = vmatpush1.bf16.msra.mxu0 %v1182
        %1348 = vmatprep.subr.bf16.mxu0 0
        %1349 = vmatpush1.bf16.msra.mxu0 0
        %1350 = vmatprep.subr.bf16.mxu0 0
        %1351 = vmatpush1.bf16.msra.mxu0 0
        %1352 = vmatprep.subr.bf16.mxu0 0
        %1353 = vmatpush1.bf16.msra.mxu0 0
        %1354 = vmatprep.subr.bf16.mxu0 0
        %1355 = vmatpush1.bf16.msra.mxu0 0
        %1356 = vmatprep.subr.bf16.mxu0 0
        %1357 = vmatpush1.bf16.msra.mxu0 0
        %1358 = vmatprep.subr.bf16.mxu0 0
        %1359 = vmatpush1.bf16.msra.mxu0 0
        %1360 = vmatprep.subr.bf16.mxu0 0
        %1361 = vmatpush1.bf16.msra.mxu0 0
        %1362 = vmatprep.subr.bf16.mxu0 0
        %1363 = vmatpush1.bf16.msra.mxu0 0
        %1364 = vmatprep.subr.bf16.mxu0 0
        %1365 = vmatpush1.bf16.msra.mxu0 0
        %1366 = vmatprep.subr.bf16.mxu0 0
        %1367 = vmatpush1.bf16.msra.mxu0 0
        %1368 = vmatprep.subr.bf16.mxu0 0
        %1369 = vmatpush1.bf16.msra.mxu0 0
        %1370 = vmatprep.subr.bf16.mxu0 0
        %1371 = vmatpush1.bf16.msra.mxu0 0
        %1372 = vmatprep.subr.bf16.mxu0 0
        %1373 = vmatpush1.bf16.msra.mxu0 0
        %1374 = vmatprep.subr.bf16.mxu0 0
        %1375 = vmatpush1.bf16.msra.mxu0 0
        %1376 = vmatprep.mubr.bf16.mxu0 0
        %1377 = vmatmul.mubr.bf16.gmra.mrb[0].mxu0 %v1342
        %v1378 = vpop.f32.mrb[0].mxu0
        %v1379 = vadd.f32 0.0, %v1378
        %v1380 = vpop.f32.mrb[0].mxu0
        %v1381 = vpop.f32.mrb[0].mxu0
        %v1382 = vpop.f32.mrb[0].mxu0
        %1383 = vdwg.mxu0
        %v1384 = vld [vmem:[%s952] sm:$0xff]
        %v1385 = vadd.f32 %v1384, %v1379
        %v1386 = vxor.u32 %v1385, 2147483648
        %v1387 = vmul.f32 %v1386, 1.442695
        %v1388 = vpow.pop %v1387
        %v1389 = vadd.f32 %v1388, 1.0
        %v1390 = vrcp.pop %v1389
        %v1391 = vmul.f32 1.0, %v1390
        %v1392 = vtanh.pop %v1385
        %v1393 = vmul.f32 %v1391, %v1325
        %1395 = vrot.lane.b32.xlu0 %v1392, 64
        %v1396 = vpop.permute.xlu0 %1395
        %v1398 = vmul.f32 %v1391, %v1396
        %1400 = vrot.lane.b32.xlu0 %v1398, 32
        %v1401 = vpop.permute.xlu0 %1400
        %v1403 = vadd.f32 %v1393, %v1401
        %v1404 = vtanh.pop %v1403
        %1406 = vrot.lane.b32.xlu0 %v1404, 64
        %v1407 = vpop.permute.xlu0 %1406
        %v1409 = vmul.f32 %v1391, %v1407
        %1411 = vrot.lane.b32.xlu0 %v1409, 32
        %v1412 = vpop.permute.xlu0 %1411
        %1414 = vst.msk [vmem:[%s983] sm:$0xff] %vm731, %v1412
        %v1415 = vpack.c.bf16 %v1409, %v1409
        %1417 = vrot.lane.b32.xlu0 %v1415, 32
        %v1418 = vpop.permute.xlu0 %1417
        %v1420 = vsel %vm731, %v1418, 0
        %1422 = vmatprep.subr.bf16.mxu0 0
        %1423 = vmatpush1.bf16.msra.mxu0 %v1181
        %1424 = vmatprep.subr.bf16.mxu0 0
        %1425 = vmatpush1.bf16.msra.mxu0 %v1182
        %1426 = vmatprep.subr.bf16.mxu0 0
        %1427 = vmatpush1.bf16.msra.mxu0 0
        %1428 = vmatprep.subr.bf16.mxu0 0
        %1429 = vmatpush1.bf16.msra.mxu0 0
        %1430 = vmatprep.subr.bf16.mxu0 0
        %1431 = vmatpush1.bf16.msra.mxu0 0
        %1432 = vmatprep.subr.bf16.mxu0 0
        %1433 = vmatpush1.bf16.msra.mxu0 0
        %1434 = vmatprep.subr.bf16.mxu0 0
        %1435 = vmatpush1.bf16.msra.mxu0 0
        %1436 = vmatprep.subr.bf16.mxu0 0
        %1437 = vmatpush1.bf16.msra.mxu0 0
        %1438 = vmatprep.subr.bf16.mxu0 0
        %1439 = vmatpush1.bf16.msra.mxu0 0
        %1440 = vmatprep.subr.bf16.mxu0 0
        %1441 = vmatpush1.bf16.msra.mxu0 0
        %1442 = vmatprep.subr.bf16.mxu0 0
        %1443 = vmatpush1.bf16.msra.mxu0 0
        %1444 = vmatprep.subr.bf16.mxu0 0
        %1445 = vmatpush1.bf16.msra.mxu0 0
        %1446 = vmatprep.subr.bf16.mxu0 0
        %1447 = vmatpush1.bf16.msra.mxu0 0
        %1448 = vmatprep.subr.bf16.mxu0 0
        %1449 = vmatpush1.bf16.msra.mxu0 0
        %1450 = vmatprep.subr.bf16.mxu0 0
        %1451 = vmatpush1.bf16.msra.mxu0 0
        %1452 = vmatprep.subr.bf16.mxu0 0
        %1453 = vmatpush1.bf16.msra.mxu0 0
        %1454 = vmatprep.mubr.bf16.mxu0 0
        %1455 = vmatmul.mubr.bf16.gmra.mrb[0].mxu0 %v1420
        %v1456 = vpop.f32.mrb[0].mxu0
        %v1457 = vadd.f32 0.0, %v1456
        %v1458 = vpop.f32.mrb[0].mxu0
        %v1459 = vpop.f32.mrb[0].mxu0
        %v1460 = vpop.f32.mrb[0].mxu0
        %1461 = vdwg.mxu0
        %1462 = vst [vmem:[%s1130] sm:$0xff] %v1457
        %1464 = vrot.lane.b32.xlu0 %v1403, 96
        %v1465 = vpop.permute.xlu0 %1464
        %1467 = vst.msk [vmem:[%s1132] sm:$0xff] %vm731, %v1465
        %v1468 = vld [vmem:[#allocation3] sm:$0xff]
        %v1469 = vld [vmem:[#allocation3 + $0x8] sm:$0xff]
        %v1470 = vld [vmem:[#allocation3 + $0x10] sm:$0xff]
        %v1471 = vld [vmem:[#allocation3 + $0x18] sm:$0xff]
        %v1472 = vpack.c.bf16 %v1469, %v1468
        %v1473 = vpack.c.bf16 %v1471, %v1470
        %v1474 = vld [vmem:[%s11] sm:$0xf]
        %v1475 = vld [vmem:[%s11 + $0x4] sm:$0xf]
        %v1476 = vld [vmem:[%s11 + $0x8] sm:$0xf]
        %v1477 = vld [vmem:[%s11 + $0xc] sm:$0xf]
        %v1482 = vunpack.c.l.b16 %v1474
        %v1483 = vunpack.c.l.b16 %v1475
        %v1484 = vunpack.c.l.b16 %v1476
        %v1485 = vunpack.c.l.b16 %v1477
        %v1486 = vpack.c.b16 %v1483, %v1482
        %v1487 = vpack.c.b16 %v1485, %v1484
        %v1491 = vsel %vm731, %v1472, 0
        %v1494 = vsel %vm731, %v1473, 0
        %1496 = vmatprep.subr.bf16.mxu0 0
        %1497 = vmatpush1.bf16.msra.mxu0 %v1486
        %1498 = vmatprep.subr.bf16.mxu0 0
        %1499 = vmatpush1.bf16.msra.mxu0 %v1487
        %1500 = vmatprep.subr.bf16.mxu0 0
        %1501 = vmatpush1.bf16.msra.mxu0 0
        %1502 = vmatprep.subr.bf16.mxu0 0
        %1503 = vmatpush1.bf16.msra.mxu0 0
        %1504 = vmatprep.subr.bf16.mxu0 0
        %1505 = vmatpush1.bf16.msra.mxu0 0
        %1506 = vmatprep.subr.bf16.mxu0 0
        %1507 = vmatpush1.bf16.msra.mxu0 0
        %1508 = vmatprep.subr.bf16.mxu0 0
        %1509 = vmatpush1.bf16.msra.mxu0 0
        %1510 = vmatprep.subr.bf16.mxu0 0
        %1511 = vmatpush1.bf16.msra.mxu0 0
        %1512 = vmatprep.subr.bf16.mxu0 0
        %1513 = vmatpush1.bf16.msra.mxu0 0
        %1514 = vmatprep.subr.bf16.mxu0 0
        %1515 = vmatpush1.bf16.msra.mxu0 0
        %1516 = vmatprep.subr.bf16.mxu0 0
        %1517 = vmatpush1.bf16.msra.mxu0 0
        %1518 = vmatprep.subr.bf16.mxu0 0
        %1519 = vmatpush1.bf16.msra.mxu0 0
        %1520 = vmatprep.subr.bf16.mxu0 0
        %1521 = vmatpush1.bf16.msra.mxu0 0
        %1522 = vmatprep.subr.bf16.mxu0 0
        %1523 = vmatpush1.bf16.msra.mxu0 0
        %1524 = vmatprep.subr.bf16.mxu0 0
        %1525 = vmatpush1.bf16.msra.mxu0 0
        %1526 = vmatprep.subr.bf16.mxu0 0
        %1527 = vmatpush1.bf16.msra.mxu0 0
        %1528 = vmatprep.mubr.bf16.mxu0 0
        %1529 = vmatmul.mubr.bf16.gmra.mrb[0].mxu0 %v1491
        %v1530 = vpop.f32.mrb[0].mxu0
        %v1531 = vadd.f32 0.0, %v1530
        %v1532 = vpop.f32.mrb[0].mxu0
        %v1533 = vpop.f32.mrb[0].mxu0
        %v1534 = vadd.f32 0.0, %v1533
        %v1535 = vpop.f32.mrb[0].mxu0
        %1536 = vmatprep.mubr.bf16.mxu0 0
        %1537 = vmatmul.mubr.bf16.gmra.mrb[0].mxu0 %v1494
        %v1538 = vpop.f32.mrb[0].mxu0
        %v1539 = vadd.f32 0.0, %v1538
        %v1540 = vpop.f32.mrb[0].mxu0
        %v1541 = vpop.f32.mrb[0].mxu0
        %v1542 = vadd.f32 0.0, %v1541
        %v1543 = vpop.f32.mrb[0].mxu0
        %1544 = vdwg.mxu0
        %1545 = vst [vmem:[%s435] sm:$0xff] %v1531
        %1546 = vst [vmem:[%s435 + $0x8] sm:$0xff] %v1534
        %1547 = vst [vmem:[%s435 + $0x10] sm:$0xff] %v1539
        %1548 = vst [vmem:[%s435 + $0x18] sm:$0xff] %v1542
        %s1549 = sand.u32 %s293, 1
        %s1550 = scalar_lea.sflag [#allocation8], %s1549
        %s1551 = sand.u32 %s293, 1
        %s1552 = smul.addr %s1551, 32
        %s1553 = scalar_lea.vmem [#allocation11], %s1552
        // Predicated region
        $region81: #{tpu_custom_call.1} parent=67 // pred_check
          %p1554 = pneg %p303
        $region82: #{tpu_custom_call.1} parent=67 // pred_check_branch
          %1556 = sbr.rel (%p1554) target = $region84
        $region83: #{tpu_custom_call.1} parent=67 // pred_region
          %s1557 = smul.u32 4, %s28
          %s1559 = ssub.s32 512, 512
          %1560 = vsyncadd %s1550, %s1559
          %s1561 = smul.addr %s1557, 128
          %s1562 = scalar_lea.hbm %s12, %s1561
          %s1563 = sshll.u32 %s1553, 4
          %s1564 = int_to_ptr.vmem [resolvable:$true] %s1563
          %1569 = dma.vmem_to_hbm [thread:$0]  %s1564, 512, %s1562, %s1550, 128, 128, 8
        $region84: #{tpu_custom_call.1} parent=67 // pred_fallthru
          _
      $region68: #{tpu_custom_call.1} parent=5 // pred_fallthru
        _
      %p1570 = scmp.le.s32.totalorder 2, %s23
      // Predicated region
      $region85: #{tpu_custom_call.1} parent=5 // pred_check
        %p1571 = pneg %p1570
      $region86: #{tpu_custom_call.1} parent=5 // pred_check_branch
        %1573 = sbr.rel (%p1571) target = $region88
      $region87: #{tpu_custom_call.1} parent=5 // pred_region
        %s1574 = ssub.s32 %s23, 2
        // Predicated region
        $region89: #{tpu_custom_call.1} parent=87 // pred_check
          %p1575 = pneg %p309
        $region90: #{tpu_custom_call.1} parent=87 // pred_check_branch
          %1577 = sbr.rel (%p1575) target = $region92
        $region91: #{tpu_custom_call.1} parent=87 // pred_region
          %s1578 = sand.u32 %s294, 1
          %s1579 = scalar_lea.sflag [#allocation8], %s1578
          %s1580 = sand.u32 %s294, 1
          %s1581 = smul.addr %s1580, 32
          %s1582 = scalar_lea.vmem [#allocation11], %s1581
          %1583 = dma.done %s1579, 512
        $region92: #{tpu_custom_call.1} parent=87 // pred_fallthru
          _
      $region88: #{tpu_custom_call.1} parent=5 // pred_fallthru
        _
    $region6: #{tpu_custom_call.1} parent=1 // loop_footer
      %s27 = sadd.s32 1, %s23
    $region7: #{tpu_custom_call.1} parent=1 // loop_footer_branch
      %22 = sbr.rel target = $region3
    $region8: #{tpu_custom_call.1} parent=1 // loop_exit
      _
    %1584 = vsyncpa [#allocation7], 1
    %s1585 = scalar_lea.sflag [#allocation7], 1
    %1586 = vsyncpa %s1585, 1
    %1587 = vsyncpa [#allocation10], 1
    %1588 = vsyncpa [#allocation8], 1
    %s1589 = scalar_lea.sflag [#allocation8], 1
    %1590 = vsyncpa %s1589, 1

</llo_original>
